<compile_context>
chip_gen: v7x
topology: tpu7x:2x2x1
jax: 0.10.0
libtpu: 0.0.40
codegen_flags: <defaults>
</compile_context>

<pallas_src>
import math
import numpy as np
import jax
import jax.numpy as jnp
from jax.experimental import pallas as pl
from jax.experimental.pallas import tpu as pltpu

# ---- module hyperparameters (match PyTorch defaults) ----
NUM_FREQS = 6
D_IN = 3
FREQ_FACTOR = math.pi
INCLUDE_INPUT = True

NF2 = 2 * NUM_FREQS                                   # 12
SIN_WIDTH = NF2 * D_IN                                # 36
INPUT_OFFSET = D_IN if INCLUDE_INPUT else 0
D_OUT = SIN_WIDTH + INPUT_OFFSET                      # 39

# Compile-time constant tables, identical to the torch buffers.
_FREQS = FREQ_FACTOR * (2.0 ** np.arange(NUM_FREQS, dtype=np.float64))   # (F,)
FREQS_2F = np.repeat(_FREQS, 2)                                           # (2F,)
PHASES_2F = np.zeros(NF2, dtype=np.float64)
PHASES_2F[1::2] = math.pi * 0.5                                           # (2F,)


def _pe_kernel(x_ref, o_ref):
    # x_ref: (D_IN,  tile_n)  -- batch on the lane axis
    # o_ref: (D_OUT, tile_n)
    x = x_ref[...]                                    # (3, tile_n)
    if INCLUDE_INPUT:
        o_ref[0:D_IN, :] = x
    # Unrolled per-band full-lane-width stores; freq/phase are immediates.
    for j in range(NF2):
        freq_j = np.float32(FREQS_2F[j])
        phase_j = np.float32(PHASES_2F[j])
        start = INPUT_OFFSET + j * D_IN
        o_ref[start:start + D_IN, :] = jnp.sin(phase_j + x * freq_j)


def positional_encoding(x, *, tile_n=512):
    """x: (B, D_IN) float32 -> (B, D_OUT) float32 (same semantics as the torch module)."""
    B, d_in = x.shape
    assert d_in == D_IN
    x = x.astype(jnp.float32)

    # Lane-dense layout: batch on the last (lane) axis; pad to a tile multiple.
    x_t = x.T                                         # (D_IN, B)
    n_tiles = pl.cdiv(B, tile_n)
    b_pad = n_tiles * tile_n
    if b_pad != B:
        x_t = jnp.pad(x_t, ((0, 0), (0, b_pad - B)))

    out_t = pl.pallas_call(
        _pe_kernel,
        out_shape=jax.ShapeDtypeStruct((D_OUT, b_pad), jnp.float32),
        grid_spec=pltpu.PrefetchScalarGridSpec(
            num_scalar_prefetch=0,
            grid=(n_tiles,),
            in_specs=[pl.BlockSpec((D_IN, tile_n), lambda i: (0, i))],
            out_specs=pl.BlockSpec((D_OUT, tile_n), lambda i: (0, i)),
        ),
        compiler_params=pltpu.CompilerParams(
            dimension_semantics=("parallel",)),
    )(x_t)

    return out_t[:, :B].T                             # (B, D_OUT)


def _reference_np(x):
    """float64 numpy reference mirroring the torch forward."""
    x64 = np.asarray(x, dtype=np.float64)             # (B, d_in)
    emb = np.sin(PHASES_2F[None, :, None] + x64[:, None, :] * FREQS_2F[None, :, None])
    emb = emb.reshape(x64.shape[0], -1)               # (B, 2F*d_in)
    if INCLUDE_INPUT:
        emb = np.concatenate([x64, emb], axis=-1)
    return emb


if __name__ == "__main__":
    key = jax.random.PRNGKey(0)
    B = 16
    x = jax.random.normal(key, (B, D_IN), dtype=jnp.float32)

    out = positional_encoding(x)
    out = jax.block_until_ready(out)

    ref = _reference_np(np.asarray(x))
    assert out.shape == (B, D_OUT), out.shape
    # Tolerance accounts for TPU EUP sin vs float64 reference on large
    # high-frequency arguments (f32 argument-reduction error ~ eps*|arg|).
    np.testing.assert_allclose(np.asarray(out, dtype=np.float64), ref,
                               rtol=1e-3, atol=5e-4)

    print("KERNEL_OK")
</pallas_src>

<mosaic_0001>
module attributes {stable_mosaic.version = 11 : i64} {
  func.func @_pe_kernel(%arg0: i32, %arg1: memref<3x512xf32, #tpu.memory_space<vmem>>, %arg2: memref<39x512xf32, #tpu.memory_space<vmem>>) attributes {dimension_semantics = [#tpu.dimension_semantics<parallel>], iteration_bounds = array<i64: 1>, scalar_prefetch = 0 : i64, scratch_operands = 0 : i64, tpu.core_type = #tpu.core_type<tc>, window_params = [{transform_indices = @transform_0, window_bounds = array<i64: 3, 512>}, {transform_indices = @transform_1, window_bounds = array<i64: 39, 512>}]} {
    %c0 = arith.constant 0 : index
    %c0_0 = arith.constant 0 : index
    %0 = vector.load %arg1[%c0, %c0_0] : memref<3x512xf32, #tpu.memory_space<vmem>>, vector<3x512xf32>
    %c0_1 = arith.constant 0 : index
    %c0_2 = arith.constant 0 : index
    %1 = vector.load %arg2[%c0_1, %c0_2] : memref<39x512xf32, #tpu.memory_space<vmem>>, vector<3x512xf32>
    tpu.vector_store %arg2[%c0_1, %c0_2], %0 {strides = array<i32>} : memref<39x512xf32, #tpu.memory_space<vmem>>, vector<3x512xf32>,
    %cst = arith.constant 3.14159274 : f32
    %2 = vector.broadcast %cst : f32 to vector<3x512xf32>
    %3 = arith.mulf %0, %2 : vector<3x512xf32>
    %cst_3 = arith.constant 0.000000e+00 : f32
    %4 = vector.broadcast %cst_3 : f32 to vector<3x512xf32>
    %5 = arith.addf %4, %3 : vector<3x512xf32>
    %6 = math.sin %5 : vector<3x512xf32>
    %c3 = arith.constant 3 : index
    %c0_4 = arith.constant 0 : index
    %7 = vector.load %arg2[%c3, %c0_4] : memref<39x512xf32, #tpu.memory_space<vmem>>, vector<3x512xf32>
    tpu.vector_store %arg2[%c3, %c0_4], %6 {strides = array<i32>} : memref<39x512xf32, #tpu.memory_space<vmem>>, vector<3x512xf32>,
    %cst_5 = arith.constant 3.14159274 : f32
    %8 = vector.broadcast %cst_5 : f32 to vector<3x512xf32>
    %9 = arith.mulf %0, %8 : vector<3x512xf32>
    %cst_6 = arith.constant 1.57079637 : f32
    %10 = vector.broadcast %cst_6 : f32 to vector<3x512xf32>
    %11 = arith.addf %10, %9 : vector<3x512xf32>
    %12 = math.sin %11 : vector<3x512xf32>
    %c6 = arith.constant 6 : index
    %c0_7 = arith.constant 0 : index
    %13 = vector.load %arg2[%c6, %c0_7] : memref<39x512xf32, #tpu.memory_space<vmem>>, vector<3x512xf32>
    tpu.vector_store %arg2[%c6, %c0_7], %12 {strides = array<i32>} : memref<39x512xf32, #tpu.memory_space<vmem>>, vector<3x512xf32>,
    %cst_8 = arith.constant 6.28318548 : f32
    %14 = vector.broadcast %cst_8 : f32 to vector<3x512xf32>
    %15 = arith.mulf %0, %14 : vector<3x512xf32>
    %cst_9 = arith.constant 0.000000e+00 : f32
    %16 = vector.broadcast %cst_9 : f32 to vector<3x512xf32>
    %17 = arith.addf %16, %15 : vector<3x512xf32>
    %18 = math.sin %17 : vector<3x512xf32>
    %c9 = arith.constant 9 : index
    %c0_10 = arith.constant 0 : index
    %19 = vector.load %arg2[%c9, %c0_10] : memref<39x512xf32, #tpu.memory_space<vmem>>, vector<3x512xf32>
    tpu.vector_store %arg2[%c9, %c0_10], %18 {strides = array<i32>} : memref<39x512xf32, #tpu.memory_space<vmem>>, vector<3x512xf32>,
    %cst_11 = arith.constant 6.28318548 : f32
    %20 = vector.broadcast %cst_11 : f32 to vector<3x512xf32>
    %21 = arith.mulf %0, %20 : vector<3x512xf32>
    %cst_12 = arith.constant 1.57079637 : f32
    %22 = vector.broadcast %cst_12 : f32 to vector<3x512xf32>
    %23 = arith.addf %22, %21 : vector<3x512xf32>
    %24 = math.sin %23 : vector<3x512xf32>
    %c12 = arith.constant 12 : index
    %c0_13 = arith.constant 0 : index
    %25 = vector.load %arg2[%c12, %c0_13] : memref<39x512xf32, #tpu.memory_space<vmem>>, vector<3x512xf32>
    tpu.vector_store %arg2[%c12, %c0_13], %24 {strides = array<i32>} : memref<39x512xf32, #tpu.memory_space<vmem>>, vector<3x512xf32>,
    %cst_14 = arith.constant 12.566371 : f32
    %26 = vector.broadcast %cst_14 : f32 to vector<3x512xf32>
    %27 = arith.mulf %0, %26 : vector<3x512xf32>
    %cst_15 = arith.constant 0.000000e+00 : f32
    %28 = vector.broadcast %cst_15 : f32 to vector<3x512xf32>
    %29 = arith.addf %28, %27 : vector<3x512xf32>
    %30 = math.sin %29 : vector<3x512xf32>
    %c15 = arith.constant 15 : index
    %c0_16 = arith.constant 0 : index
    %31 = vector.load %arg2[%c15, %c0_16] : memref<39x512xf32, #tpu.memory_space<vmem>>, vector<3x512xf32>
    tpu.vector_store %arg2[%c15, %c0_16], %30 {strides = array<i32>} : memref<39x512xf32, #tpu.memory_space<vmem>>, vector<3x512xf32>,
    %cst_17 = arith.constant 12.566371 : f32
    %32 = vector.broadcast %cst_17 : f32 to vector<3x512xf32>
    %33 = arith.mulf %0, %32 : vector<3x512xf32>
    %cst_18 = arith.constant 1.57079637 : f32
    %34 = vector.broadcast %cst_18 : f32 to vector<3x512xf32>
    %35 = arith.addf %34, %33 : vector<3x512xf32>
    %36 = math.sin %35 : vector<3x512xf32>
    %c18 = arith.constant 18 : index
    %c0_19 = arith.constant 0 : index
    %37 = vector.load %arg2[%c18, %c0_19] : memref<39x512xf32, #tpu.memory_space<vmem>>, vector<3x512xf32>
    tpu.vector_store %arg2[%c18, %c0_19], %36 {strides = array<i32>} : memref<39x512xf32, #tpu.memory_space<vmem>>, vector<3x512xf32>,
    %cst_20 = arith.constant 25.1327419 : f32
    %38 = vector.broadcast %cst_20 : f32 to vector<3x512xf32>
    %39 = arith.mulf %0, %38 : vector<3x512xf32>
    %cst_21 = arith.constant 0.000000e+00 : f32
    %40 = vector.broadcast %cst_21 : f32 to vector<3x512xf32>
    %41 = arith.addf %40, %39 : vector<3x512xf32>
    %42 = math.sin %41 : vector<3x512xf32>
    %c21 = arith.constant 21 : index
    %c0_22 = arith.constant 0 : index
    %43 = vector.load %arg2[%c21, %c0_22] : memref<39x512xf32, #tpu.memory_space<vmem>>, vector<3x512xf32>
    tpu.vector_store %arg2[%c21, %c0_22], %42 {strides = array<i32>} : memref<39x512xf32, #tpu.memory_space<vmem>>, vector<3x512xf32>,
    %cst_23 = arith.constant 25.1327419 : f32
    %44 = vector.broadcast %cst_23 : f32 to vector<3x512xf32>
    %45 = arith.mulf %0, %44 : vector<3x512xf32>
    %cst_24 = arith.constant 1.57079637 : f32
    %46 = vector.broadcast %cst_24 : f32 to vector<3x512xf32>
    %47 = arith.addf %46, %45 : vector<3x512xf32>
    %48 = math.sin %47 : vector<3x512xf32>
    %c24 = arith.constant 24 : index
    %c0_25 = arith.constant 0 : index
    %49 = vector.load %arg2[%c24, %c0_25] : memref<39x512xf32, #tpu.memory_space<vmem>>, vector<3x512xf32>
    tpu.vector_store %arg2[%c24, %c0_25], %48 {strides = array<i32>} : memref<39x512xf32, #tpu.memory_space<vmem>>, vector<3x512xf32>,
    %cst_26 = arith.constant 50.2654839 : f32
    %50 = vector.broadcast %cst_26 : f32 to vector<3x512xf32>
    %51 = arith.mulf %0, %50 : vector<3x512xf32>
    %cst_27 = arith.constant 0.000000e+00 : f32
    %52 = vector.broadcast %cst_27 : f32 to vector<3x512xf32>
    %53 = arith.addf %52, %51 : vector<3x512xf32>
    %54 = math.sin %53 : vector<3x512xf32>
    %c27 = arith.constant 27 : index
    %c0_28 = arith.constant 0 : index
    %55 = vector.load %arg2[%c27, %c0_28] : memref<39x512xf32, #tpu.memory_space<vmem>>, vector<3x512xf32>
    tpu.vector_store %arg2[%c27, %c0_28], %54 {strides = array<i32>} : memref<39x512xf32, #tpu.memory_space<vmem>>, vector<3x512xf32>,
    %cst_29 = arith.constant 50.2654839 : f32
    %56 = vector.broadcast %cst_29 : f32 to vector<3x512xf32>
    %57 = arith.mulf %0, %56 : vector<3x512xf32>
    %cst_30 = arith.constant 1.57079637 : f32
    %58 = vector.broadcast %cst_30 : f32 to vector<3x512xf32>
    %59 = arith.addf %58, %57 : vector<3x512xf32>
    %60 = math.sin %59 : vector<3x512xf32>
    %c30 = arith.constant 30 : index
    %c0_31 = arith.constant 0 : index
    %61 = vector.load %arg2[%c30, %c0_31] : memref<39x512xf32, #tpu.memory_space<vmem>>, vector<3x512xf32>
    tpu.vector_store %arg2[%c30, %c0_31], %60 {strides = array<i32>} : memref<39x512xf32, #tpu.memory_space<vmem>>, vector<3x512xf32>,
    %cst_32 = arith.constant 100.530968 : f32
    %62 = vector.broadcast %cst_32 : f32 to vector<3x512xf32>
    %63 = arith.mulf %0, %62 : vector<3x512xf32>
    %cst_33 = arith.constant 0.000000e+00 : f32
    %64 = vector.broadcast %cst_33 : f32 to vector<3x512xf32>
    %65 = arith.addf %64, %63 : vector<3x512xf32>
    %66 = math.sin %65 : vector<3x512xf32>
    %c33 = arith.constant 33 : index
    %c0_34 = arith.constant 0 : index
    %67 = vector.load %arg2[%c33, %c0_34] : memref<39x512xf32, #tpu.memory_space<vmem>>, vector<3x512xf32>
    tpu.vector_store %arg2[%c33, %c0_34], %66 {strides = array<i32>} : memref<39x512xf32, #tpu.memory_space<vmem>>, vector<3x512xf32>,
    %cst_35 = arith.constant 100.530968 : f32
    %68 = vector.broadcast %cst_35 : f32 to vector<3x512xf32>
    %69 = arith.mulf %0, %68 : vector<3x512xf32>
    %cst_36 = arith.constant 1.57079637 : f32
    %70 = vector.broadcast %cst_36 : f32 to vector<3x512xf32>
    %71 = arith.addf %70, %69 : vector<3x512xf32>
    %72 = math.sin %71 : vector<3x512xf32>
    %c36 = arith.constant 36 : index
    %c0_37 = arith.constant 0 : index
    %73 = vector.load %arg2[%c36, %c0_37] : memref<39x512xf32, #tpu.memory_space<vmem>>, vector<3x512xf32>
    tpu.vector_store %arg2[%c36, %c0_37], %72 {strides = array<i32>} : memref<39x512xf32, #tpu.memory_space<vmem>>, vector<3x512xf32>,
    return
  }
  func.func @transform_0(%arg0: i32) -> (i32, i32) {
    %c0_i32 = arith.constant 0 : i32
    %c0_i32_0 = arith.constant 0 : i32
    return %c0_i32, %arg0 : i32, i32
  }
  func.func @transform_1(%arg0: i32) -> (i32, i32) {
    %c0_i32 = arith.constant 0 : i32
    %c0_i32_0 = arith.constant 0 : i32
    return %c0_i32, %arg0 : i32, i32
  }
}

</mosaic_0001>

<llo_original>
// kernel: tpu_custom_call.1
$region0: #{tpu_custom_call.1}
  #allocation0 [shape = 'u32[]', space=smem, size = 0x4, offset = 0x4, fixed_abs, tag = 'smem constant byte address 0x4 - core index']
  #allocation1 [shape = 'u32[144,128]{1,0:T(1,128)}', space=vmem, size = 0x12000, scoped, tag = 'internal scratch']
  %s0 = inlined_call_operand.hbm [shape: f32[3,512], index: 0, kind: input, shape index: {}]
  %s1 = inlined_call_operand.hbm [shape: f32[39,512], index: 1, kind: output, shape index: {}]
  %s2 = sld [smem:[#allocation0]]
  $region18: #{tpu_custom_call.1} parent=0
    _
  %s4 = ssub.s32 1, %s2
  %s5 = scalar_select 0, %s4, %s2
  $region1: #{tpu_custom_call.1} parent=0
    #allocation2 [shape = 'u8[8192]{0}', space=vmem, size = 0x2000, scoped, tag = 'input window, operand 0, single buffered']
    #allocation3 [shape = 's32[1]{0}', space=sflag, size = 0x4, scoped, tag = 'scoped memory for tpu_custom_call.1']
    #allocation4 [shape = 's32[1]{0}', space=sflag, size = 0x4, scoped, tag = 'scoped memory for tpu_custom_call.1']
    #allocation5 [shape = 'u8[81920]{0}', space=vmem, size = 0x14000, scoped, tag = 'output window, operand 0, single buffered']
    %6 = vsyncpa [#allocation3], 0
    %7 = vsyncpa [#allocation4], 0
    // Predicated region
    $region2: #{tpu_custom_call.1} parent=1 // pred_check
      _
    $region3: #{tpu_custom_call.1} parent=1 // pred_check_branch
      %9 = sbr.rel (0) target = $region5
    $region4: #{tpu_custom_call.1} parent=1 // pred_region
      %s11 = ssub.s32 256, 256
      %12 = vsyncadd [#allocation3], %s11
      %s14 = sshll.u32 [#allocation2], 4
      %s15 = int_to_ptr.vmem [resolvable:$true] %s14
      %17 = dma.hbm_to_vmem [thread:$0]  %s0, 256, %s15, [#allocation3]
    $region5: #{tpu_custom_call.1} parent=1 // pred_fallthru
      _
    // Predicated region
    $region6: #{tpu_custom_call.1} parent=1 // pred_check
      _
    $region7: #{tpu_custom_call.1} parent=1 // pred_check_branch
      %19 = sbr.rel (0) target = $region9
    $region8: #{tpu_custom_call.1} parent=1 // pred_region
      %20 = dma.done [#allocation3], 256
    $region9: #{tpu_custom_call.1} parent=1 // pred_fallthru
      _
    %v21 = vld [vmem:[#allocation2] sm:$0x77]
    %v22 = vld [vmem:[#allocation2 + $0x8] sm:$0x77]
    %v25 = vcombine.high %v21, %v21
    %v26 = vcombine.high %v22, %v22
    %29 = vst [vmem:[#allocation5] sm:$0x7] %v21
    %30 = vst [vmem:[#allocation5 + $0x8] sm:$0x7] %v25
    %31 = vst [vmem:[#allocation5 + $0x10] sm:$0x7] %v22
    %32 = vst [vmem:[#allocation5 + $0x18] sm:$0x7] %v26
    %v33 = vmul.f32 %v21, 3.1415927
    %v34 = vmul.f32 %v22, 3.1415927
    %v35 = vadd.f32 %v33, 0.0
    %v36 = vadd.f32 %v34, 0.0
    %v37 = vand.u32 2147483647, %v35
    %vm38 = vcmp.le.f32.partialorder %v37, 0.7853982
    %vm39 = vcmp.lt.s32.totalorder %v35, 0
    %v40 = vand.u32 %v35, 2139095040
    %v41 = vshrl.u32 %v40, 23
    %v42 = vsub.s32 %v41, 127
    %v43 = vand.u32 2147483647, %v35
    %v44 = vand.u32 %v43, 8388607
    %v45 = vor.u32 %v44, 8388608
    %v46 = vsub.s32 0, %v45
    %v47 = vadd.s32 %v42, 1
    %vm48 = vcmp.gt.s32.totalorder %v47, 0
    %v49 = vsel %vm48, %v47, 0
    %v50 = vshrl.u32 %v49, 5
    %v51 = vand.u32 %v49, 31
    %v52 = vsub.s32 32, %v51
    %v53 = vshrl.u32 683565275, %v52
    %v54 = vshll.u32 683565275, %v51
    %v55 = vshrl.u32 2475754826, %v52
    %v56 = vor.u32 %v54, %v55
    %v57 = vshll.u32 2475754826, %v51
    %v58 = vshrl.u32 2131351028, %v52
    %v59 = vor.u32 %v57, %v58
    %v60 = vshll.u32 2131351028, %v51
    %v61 = vshrl.u32 2102212464, %v52
    %v62 = vor.u32 %v60, %v61
    %v63 = vshll.u32 2102212464, %v51
    %v64 = vshrl.u32 920167782, %v52
    %v65 = vor.u32 %v63, %v64
    %v66 = vshll.u32 920167782, %v51
    %v67 = vshrl.u32 1326507024, %v52
    %v68 = vor.u32 %v66, %v67
    %vm69 = vcmp.lt.s32.totalorder %v50, 1
    %vm70 = vcmp.lt.s32.totalorder %v50, 2
    %vm71 = vcmp.lt.s32.totalorder %v50, 3
    %vm72 = vcmp.lt.s32.totalorder %v50, 4
    %v73 = vsel %vm69, %v53, %v56
    %v74 = vsel %vm72, %v62, 2102212464
    %v75 = vsel %vm71, %v59, %v74
    %v76 = vsel %vm70, %v73, %v75
    %v77 = vsel %vm69, %v56, %v59
    %v78 = vsel %vm72, %v65, 920167782
    %v79 = vsel %vm71, %v62, %v78
    %v80 = vsel %vm70, %v77, %v79
    %v81 = vsel %vm69, %v59, %v62
    %v82 = vsel %vm72, %v68, 1326507024
    %v83 = vsel %vm71, %v65, %v82
    %v84 = vsel %vm70, %v81, %v83
    %v85 = vshll.u32 %v45, 8
    %v86 = vmul.u32.u64.compose %v85, %v84
    %v87 = vextract.low.u32 %v86
    %v88 = vextract.high.u32 %v86
    %v89 = vmul.u32.u64.compose %v85, %v80
    %v90 = vextract.low.u32 %v89
    %v91 = vextract.high.u32 %v89
    %v92 = vmul.u32 %v85, %v76
    %v93 = vadd.s32 %v88, %v90
    %vm94 = vc.u32 %v88, %v90
    %v95 = vadd.s32 %v91, 1
    %v96 = vsel %vm94, %v95, %v91
    %v97 = vadd.s32 %v92, %v96
    %v98 = vadd.s32 %v97, 536870912
    %v99 = vshrl.u32 %v98, 30
    %v100 = vshll.u32 %v99, 30
    %v101 = vsub.s32 %v97, %v100
    %vm102 = vcmp.lt.s32.totalorder %v101, 0
    %v103 = vsub.s32 0, %v101
    %v104 = vsel %vm102, %v103, %v101
    %v105 = vclz %v104
    %v106 = vsub.s32 %v105, 2
    %vm107 = vcmp.gt.s32.totalorder 0, %v106
    %v108 = vsel %vm107, 0, %v106
    %v109 = vsub.s32 32, %v108
    %v110 = vshll.u32 %v101, %v108
    %v111 = vshrl.u32 %v93, %v109
    %v112 = vor.u32 %v110, %v111
    %v113 = vsub.s32 4294967266, %v108
    %v114 = vadd.s32 %v113, 127
    %v115 = vshll.u32 %v114, 23
    %v116 = vor.u32 4788187, %v115
    %v117 = vand.u32 2147483647, %v116
    %v119 = vcvt.s32.f32 %v112
    %v120 = vmul.f32 %v119, %v117
    %v121 = vxor.u32 %v120, 2147483648
    %v122 = vsel %vm39, %v121, %v120
    %v123 = vsub.s32 4, %v99
    %v124 = vsel %vm39, %v123, %v99
    %v125 = vsel %vm38, %v35, %v122
    %v126 = vsel %vm38, 0, %v124
    %v127 = vcosq.f32.pop %v125
    %v128 = vsinq.f32.pop %v125
    %vm129 = vweird.f32 %v35
    %v130 = vadd.s32 %v126, 3
    %v131 = vand.u32 %v130, 3
    %vm132 = vcmp.lt.s32.totalorder %v131, 2
    %vm133 = vcmp.eq.s32.totalorder %v131, 0
    %v134 = vxor.u32 %v128, 2147483648
    %v135 = vsel %vm133, %v127, %v134
    %vm136 = vcmp.eq.s32.totalorder %v131, 2
    %v137 = vxor.u32 %v127, 2147483648
    %v138 = vsel %vm136, %v137, %v128
    %v139 = vsel %vm132, %v135, %v138
    %v140 = vsel %vm129, nan, %v139
    %v141 = vand.u32 2147483647, %v36
    %vm142 = vcmp.le.f32.partialorder %v141, 0.7853982
    %vm143 = vcmp.lt.s32.totalorder %v36, 0
    %v144 = vand.u32 %v36, 2139095040
    %v145 = vshrl.u32 %v144, 23
    %v146 = vsub.s32 %v145, 127
    %v147 = vand.u32 2147483647, %v36
    %v148 = vand.u32 %v147, 8388607
    %v149 = vor.u32 %v148, 8388608
    %v150 = vsub.s32 0, %v149
    %v151 = vadd.s32 %v146, 1
    %vm152 = vcmp.gt.s32.totalorder %v151, 0
    %v153 = vsel %vm152, %v151, 0
    %v154 = vshrl.u32 %v153, 5
    %v155 = vand.u32 %v153, 31
    %v156 = vsub.s32 32, %v155
    %v157 = vshrl.u32 683565275, %v156
    %v158 = vshll.u32 683565275, %v155
    %v159 = vshrl.u32 2475754826, %v156
    %v160 = vor.u32 %v158, %v159
    %v161 = vshll.u32 2475754826, %v155
    %v162 = vshrl.u32 2131351028, %v156
    %v163 = vor.u32 %v161, %v162
    %v164 = vshll.u32 2131351028, %v155
    %v165 = vshrl.u32 2102212464, %v156
    %v166 = vor.u32 %v164, %v165
    %v167 = vshll.u32 2102212464, %v155
    %v168 = vshrl.u32 920167782, %v156
    %v169 = vor.u32 %v167, %v168
    %v170 = vshll.u32 920167782, %v155
    %v171 = vshrl.u32 1326507024, %v156
    %v172 = vor.u32 %v170, %v171
    %vm173 = vcmp.lt.s32.totalorder %v154, 1
    %vm174 = vcmp.lt.s32.totalorder %v154, 2
    %vm175 = vcmp.lt.s32.totalorder %v154, 3
    %vm176 = vcmp.lt.s32.totalorder %v154, 4
    %v177 = vsel %vm173, %v157, %v160
    %v178 = vsel %vm176, %v166, 2102212464
    %v179 = vsel %vm175, %v163, %v178
    %v180 = vsel %vm174, %v177, %v179
    %v181 = vsel %vm173, %v160, %v163
    %v182 = vsel %vm176, %v169, 920167782
    %v183 = vsel %vm175, %v166, %v182
    %v184 = vsel %vm174, %v181, %v183
    %v185 = vsel %vm173, %v163, %v166
    %v186 = vsel %vm176, %v172, 1326507024
    %v187 = vsel %vm175, %v169, %v186
    %v188 = vsel %vm174, %v185, %v187
    %v189 = vshll.u32 %v149, 8
    %v190 = vmul.u32.u64.compose %v189, %v188
    %v191 = vextract.low.u32 %v190
    %v192 = vextract.high.u32 %v190
    %v193 = vmul.u32.u64.compose %v189, %v184
    %v194 = vextract.low.u32 %v193
    %v195 = vextract.high.u32 %v193
    %v196 = vmul.u32 %v189, %v180
    %v197 = vadd.s32 %v192, %v194
    %vm198 = vc.u32 %v192, %v194
    %v199 = vadd.s32 %v195, 1
    %v200 = vsel %vm198, %v199, %v195
    %v201 = vadd.s32 %v196, %v200
    %v202 = vadd.s32 %v201, 536870912
    %v203 = vshrl.u32 %v202, 30
    %v204 = vshll.u32 %v203, 30
    %v205 = vsub.s32 %v201, %v204
    %vm206 = vcmp.lt.s32.totalorder %v205, 0
    %v207 = vsub.s32 0, %v205
    %v208 = vsel %vm206, %v207, %v205
    %v209 = vclz %v208
    %v210 = vsub.s32 %v209, 2
    %vm211 = vcmp.gt.s32.totalorder 0, %v210
    %v212 = vsel %vm211, 0, %v210
    %v213 = vsub.s32 32, %v212
    %v214 = vshll.u32 %v205, %v212
    %v215 = vshrl.u32 %v197, %v213
    %v216 = vor.u32 %v214, %v215
    %v217 = vsub.s32 4294967266, %v212
    %v218 = vadd.s32 %v217, 127
    %v219 = vshll.u32 %v218, 23
    %v220 = vor.u32 4788187, %v219
    %v221 = vand.u32 2147483647, %v220
    %v223 = vcvt.s32.f32 %v216
    %v224 = vmul.f32 %v223, %v221
    %v225 = vxor.u32 %v224, 2147483648
    %v226 = vsel %vm143, %v225, %v224
    %v227 = vsub.s32 4, %v203
    %v228 = vsel %vm143, %v227, %v203
    %v229 = vsel %vm142, %v36, %v226
    %v230 = vsel %vm142, 0, %v228
    %v231 = vcosq.f32.pop %v229
    %v232 = vsinq.f32.pop %v229
    %vm233 = vweird.f32 %v36
    %v234 = vadd.s32 %v230, 3
    %v235 = vand.u32 %v234, 3
    %vm236 = vcmp.lt.s32.totalorder %v235, 2
    %vm237 = vcmp.eq.s32.totalorder %v235, 0
    %v238 = vxor.u32 %v232, 2147483648
    %v239 = vsel %vm237, %v231, %v238
    %vm240 = vcmp.eq.s32.totalorder %v235, 2
    %v241 = vxor.u32 %v231, 2147483648
    %v242 = vsel %vm240, %v241, %v232
    %v243 = vsel %vm236, %v239, %v242
    %v244 = vsel %vm233, nan, %v243
    %v247 = vcombine.high %v140, %v140
    %v248 = vcombine.high %v244, %v244
    %v249 = vrot.slane %v140, 5
    %v250 = vrot.slane %v247, 5
    %v251 = vrot.slane %v244, 5
    %v252 = vrot.slane %v248, 5
    %257 = vst [vmem:[#allocation5] sm:$0x38] %v249
    %258 = vst [vmem:[#allocation5 + $0x8] sm:$0x38] %v250
    %259 = vst [vmem:[#allocation5 + $0x10] sm:$0x38] %v251
    %260 = vst [vmem:[#allocation5 + $0x18] sm:$0x38] %v252
    %v261 = vadd.f32 %v33, 1.5707964
    %v262 = vadd.f32 %v34, 1.5707964
    %v263 = vand.u32 2147483647, %v261
    %vm264 = vcmp.le.f32.partialorder %v263, 0.7853982
    %vm265 = vcmp.lt.s32.totalorder %v261, 0
    %v266 = vand.u32 %v261, 2139095040
    %v267 = vshrl.u32 %v266, 23
    %v268 = vsub.s32 %v267, 127
    %v269 = vand.u32 2147483647, %v261
    %v270 = vand.u32 %v269, 8388607
    %v271 = vor.u32 %v270, 8388608
    %v272 = vsub.s32 0, %v271
    %v273 = vadd.s32 %v268, 1
    %vm274 = vcmp.gt.s32.totalorder %v273, 0
    %v275 = vsel %vm274, %v273, 0
    %v276 = vshrl.u32 %v275, 5
    %v277 = vand.u32 %v275, 31
    %v278 = vsub.s32 32, %v277
    %v279 = vshrl.u32 683565275, %v278
    %v280 = vshll.u32 683565275, %v277
    %v281 = vshrl.u32 2475754826, %v278
    %v282 = vor.u32 %v280, %v281
    %v283 = vshll.u32 2475754826, %v277
    %v284 = vshrl.u32 2131351028, %v278
    %v285 = vor.u32 %v283, %v284
    %v286 = vshll.u32 2131351028, %v277
    %v287 = vshrl.u32 2102212464, %v278
    %v288 = vor.u32 %v286, %v287
    %v289 = vshll.u32 2102212464, %v277
    %v290 = vshrl.u32 920167782, %v278
    %v291 = vor.u32 %v289, %v290
    %v292 = vshll.u32 920167782, %v277
    %v293 = vshrl.u32 1326507024, %v278
    %v294 = vor.u32 %v292, %v293
    %vm295 = vcmp.lt.s32.totalorder %v276, 1
    %vm296 = vcmp.lt.s32.totalorder %v276, 2
    %vm297 = vcmp.lt.s32.totalorder %v276, 3
    %vm298 = vcmp.lt.s32.totalorder %v276, 4
    %v299 = vsel %vm295, %v279, %v282
    %v300 = vsel %vm298, %v288, 2102212464
    %v301 = vsel %vm297, %v285, %v300
    %v302 = vsel %vm296, %v299, %v301
    %v303 = vsel %vm295, %v282, %v285
    %v304 = vsel %vm298, %v291, 920167782
    %v305 = vsel %vm297, %v288, %v304
    %v306 = vsel %vm296, %v303, %v305
    %v307 = vsel %vm295, %v285, %v288
    %v308 = vsel %vm298, %v294, 1326507024
    %v309 = vsel %vm297, %v291, %v308
    %v310 = vsel %vm296, %v307, %v309
    %v311 = vshll.u32 %v271, 8
    %v312 = vmul.u32.u64.compose %v311, %v310
    %v313 = vextract.low.u32 %v312
    %v314 = vextract.high.u32 %v312
    %v315 = vmul.u32.u64.compose %v311, %v306
    %v316 = vextract.low.u32 %v315
    %v317 = vextract.high.u32 %v315
    %v318 = vmul.u32 %v311, %v302
    %v319 = vadd.s32 %v314, %v316
    %vm320 = vc.u32 %v314, %v316
    %v321 = vadd.s32 %v317, 1
    %v322 = vsel %vm320, %v321, %v317
    %v323 = vadd.s32 %v318, %v322
    %v324 = vadd.s32 %v323, 536870912
    %v325 = vshrl.u32 %v324, 30
    %v326 = vshll.u32 %v325, 30
    %v327 = vsub.s32 %v323, %v326
    %vm328 = vcmp.lt.s32.totalorder %v327, 0
    %v329 = vsub.s32 0, %v327
    %v330 = vsel %vm328, %v329, %v327
    %v331 = vclz %v330
    %v332 = vsub.s32 %v331, 2
    %vm333 = vcmp.gt.s32.totalorder 0, %v332
    %v334 = vsel %vm333, 0, %v332
    %v335 = vsub.s32 32, %v334
    %v336 = vshll.u32 %v327, %v334
    %v337 = vshrl.u32 %v319, %v335
    %v338 = vor.u32 %v336, %v337
    %v339 = vsub.s32 4294967266, %v334
    %v340 = vadd.s32 %v339, 127
    %v341 = vshll.u32 %v340, 23
    %v342 = vor.u32 4788187, %v341
    %v343 = vand.u32 2147483647, %v342
    %v345 = vcvt.s32.f32 %v338
    %v346 = vmul.f32 %v345, %v343
    %v347 = vxor.u32 %v346, 2147483648
    %v348 = vsel %vm265, %v347, %v346
    %v349 = vsub.s32 4, %v325
    %v350 = vsel %vm265, %v349, %v325
    %v351 = vsel %vm264, %v261, %v348
    %v352 = vsel %vm264, 0, %v350
    %v353 = vcosq.f32.pop %v351
    %v354 = vsinq.f32.pop %v351
    %vm355 = vweird.f32 %v261
    %v356 = vadd.s32 %v352, 3
    %v357 = vand.u32 %v356, 3
    %vm358 = vcmp.lt.s32.totalorder %v357, 2
    %vm359 = vcmp.eq.s32.totalorder %v357, 0
    %v360 = vxor.u32 %v354, 2147483648
    %v361 = vsel %vm359, %v353, %v360
    %vm362 = vcmp.eq.s32.totalorder %v357, 2
    %v363 = vxor.u32 %v353, 2147483648
    %v364 = vsel %vm362, %v363, %v354
    %v365 = vsel %vm358, %v361, %v364
    %v366 = vsel %vm355, nan, %v365
    %v367 = vand.u32 2147483647, %v262
    %vm368 = vcmp.le.f32.partialorder %v367, 0.7853982
    %vm369 = vcmp.lt.s32.totalorder %v262, 0
    %v370 = vand.u32 %v262, 2139095040
    %v371 = vshrl.u32 %v370, 23
    %v372 = vsub.s32 %v371, 127
    %v373 = vand.u32 2147483647, %v262
    %v374 = vand.u32 %v373, 8388607
    %v375 = vor.u32 %v374, 8388608
    %v376 = vsub.s32 0, %v375
    %v377 = vadd.s32 %v372, 1
    %vm378 = vcmp.gt.s32.totalorder %v377, 0
    %v379 = vsel %vm378, %v377, 0
    %v380 = vshrl.u32 %v379, 5
    %v381 = vand.u32 %v379, 31
    %v382 = vsub.s32 32, %v381
    %v383 = vshrl.u32 683565275, %v382
    %v384 = vshll.u32 683565275, %v381
    %v385 = vshrl.u32 2475754826, %v382
    %v386 = vor.u32 %v384, %v385
    %v387 = vshll.u32 2475754826, %v381
    %v388 = vshrl.u32 2131351028, %v382
    %v389 = vor.u32 %v387, %v388
    %v390 = vshll.u32 2131351028, %v381
    %v391 = vshrl.u32 2102212464, %v382
    %v392 = vor.u32 %v390, %v391
    %v393 = vshll.u32 2102212464, %v381
    %v394 = vshrl.u32 920167782, %v382
    %v395 = vor.u32 %v393, %v394
    %v396 = vshll.u32 920167782, %v381
    %v397 = vshrl.u32 1326507024, %v382
    %v398 = vor.u32 %v396, %v397
    %vm399 = vcmp.lt.s32.totalorder %v380, 1
    %vm400 = vcmp.lt.s32.totalorder %v380, 2
    %vm401 = vcmp.lt.s32.totalorder %v380, 3
    %vm402 = vcmp.lt.s32.totalorder %v380, 4
    %v403 = vsel %vm399, %v383, %v386
    %v404 = vsel %vm402, %v392, 2102212464
    %v405 = vsel %vm401, %v389, %v404
    %v406 = vsel %vm400, %v403, %v405
    %v407 = vsel %vm399, %v386, %v389
    %v408 = vsel %vm402, %v395, 920167782
    %v409 = vsel %vm401, %v392, %v408
    %v410 = vsel %vm400, %v407, %v409
    %v411 = vsel %vm399, %v389, %v392
    %v412 = vsel %vm402, %v398, 1326507024
    %v413 = vsel %vm401, %v395, %v412
    %v414 = vsel %vm400, %v411, %v413
    %v415 = vshll.u32 %v375, 8
    %v416 = vmul.u32.u64.compose %v415, %v414
    %v417 = vextract.low.u32 %v416
    %v418 = vextract.high.u32 %v416
    %v419 = vmul.u32.u64.compose %v415, %v410
    %v420 = vextract.low.u32 %v419
    %v421 = vextract.high.u32 %v419
    %v422 = vmul.u32 %v415, %v406
    %v423 = vadd.s32 %v418, %v420
    %vm424 = vc.u32 %v418, %v420
    %v425 = vadd.s32 %v421, 1
    %v426 = vsel %vm424, %v425, %v421
    %v427 = vadd.s32 %v422, %v426
    %v428 = vadd.s32 %v427, 536870912
    %v429 = vshrl.u32 %v428, 30
    %v430 = vshll.u32 %v429, 30
    %v431 = vsub.s32 %v427, %v430
    %vm432 = vcmp.lt.s32.totalorder %v431, 0
    %v433 = vsub.s32 0, %v431
    %v434 = vsel %vm432, %v433, %v431
    %v435 = vclz %v434
    %v436 = vsub.s32 %v435, 2
    %vm437 = vcmp.gt.s32.totalorder 0, %v436
    %v438 = vsel %vm437, 0, %v436
    %v439 = vsub.s32 32, %v438
    %v440 = vshll.u32 %v431, %v438
    %v441 = vshrl.u32 %v423, %v439
    %v442 = vor.u32 %v440, %v441
    %v443 = vsub.s32 4294967266, %v438
    %v444 = vadd.s32 %v443, 127
    %v445 = vshll.u32 %v444, 23
    %v446 = vor.u32 4788187, %v445
    %v447 = vand.u32 2147483647, %v446
    %v449 = vcvt.s32.f32 %v442
    %v450 = vmul.f32 %v449, %v447
    %v451 = vxor.u32 %v450, 2147483648
    %v452 = vsel %vm369, %v451, %v450
    %v453 = vsub.s32 4, %v429
    %v454 = vsel %vm369, %v453, %v429
    %v455 = vsel %vm368, %v262, %v452
    %v456 = vsel %vm368, 0, %v454
    %v457 = vcosq.f32.pop %v455
    %v458 = vsinq.f32.pop %v455
    %vm459 = vweird.f32 %v262
    %v460 = vadd.s32 %v456, 3
    %v461 = vand.u32 %v460, 3
    %vm462 = vcmp.lt.s32.totalorder %v461, 2
    %vm463 = vcmp.eq.s32.totalorder %v461, 0
    %v464 = vxor.u32 %v458, 2147483648
    %v465 = vsel %vm463, %v457, %v464
    %vm466 = vcmp.eq.s32.totalorder %v461, 2
    %v467 = vxor.u32 %v457, 2147483648
    %v468 = vsel %vm466, %v467, %v458
    %v469 = vsel %vm462, %v465, %v468
    %v470 = vsel %vm459, nan, %v469
    %v473 = vcombine.high %v366, %v366
    %v474 = vcombine.high %v470, %v470
    %v475 = vrot.slane %v366, 2
    %v476 = vrot.slane %v473, 2
    %v477 = vrot.slane %v470, 2
    %v478 = vrot.slane %v474, 2
    %483 = vst [vmem:[#allocation5] sm:$0xc0] %v475
    %484 = vst [vmem:[#allocation5 + $0x8] sm:$0xc0] %v476
    %485 = vst [vmem:[#allocation5 + $0x10] sm:$0xc0] %v477
    %486 = vst [vmem:[#allocation5 + $0x18] sm:$0xc0] %v478
    %487 = vst [vmem:[#allocation5 + $0x20] sm:$0x1] %v475
    %488 = vst [vmem:[#allocation5 + $0x28] sm:$0x1] %v476
    %489 = vst [vmem:[#allocation5 + $0x30] sm:$0x1] %v477
    %490 = vst [vmem:[#allocation5 + $0x38] sm:$0x1] %v478
    %v491 = vmul.f32 %v21, 6.2831855
    %v492 = vmul.f32 %v22, 6.2831855
    %v493 = vadd.f32 %v491, 0.0
    %v494 = vadd.f32 %v492, 0.0
    %v495 = vand.u32 2147483647, %v493
    %vm496 = vcmp.le.f32.partialorder %v495, 0.7853982
    %vm497 = vcmp.lt.s32.totalorder %v493, 0
    %v498 = vand.u32 %v493, 2139095040
    %v499 = vshrl.u32 %v498, 23
    %v500 = vsub.s32 %v499, 127
    %v501 = vand.u32 2147483647, %v493
    %v502 = vand.u32 %v501, 8388607
    %v503 = vor.u32 %v502, 8388608
    %v504 = vsub.s32 0, %v503
    %v505 = vadd.s32 %v500, 1
    %vm506 = vcmp.gt.s32.totalorder %v505, 0
    %v507 = vsel %vm506, %v505, 0
    %v508 = vshrl.u32 %v507, 5
    %v509 = vand.u32 %v507, 31
    %v510 = vsub.s32 32, %v509
    %v511 = vshrl.u32 683565275, %v510
    %v512 = vshll.u32 683565275, %v509
    %v513 = vshrl.u32 2475754826, %v510
    %v514 = vor.u32 %v512, %v513
    %v515 = vshll.u32 2475754826, %v509
    %v516 = vshrl.u32 2131351028, %v510
    %v517 = vor.u32 %v515, %v516
    %v518 = vshll.u32 2131351028, %v509
    %v519 = vshrl.u32 2102212464, %v510
    %v520 = vor.u32 %v518, %v519
    %v521 = vshll.u32 2102212464, %v509
    %v522 = vshrl.u32 920167782, %v510
    %v523 = vor.u32 %v521, %v522
    %v524 = vshll.u32 920167782, %v509
    %v525 = vshrl.u32 1326507024, %v510
    %v526 = vor.u32 %v524, %v525
    %vm527 = vcmp.lt.s32.totalorder %v508, 1
    %vm528 = vcmp.lt.s32.totalorder %v508, 2
    %vm529 = vcmp.lt.s32.totalorder %v508, 3
    %vm530 = vcmp.lt.s32.totalorder %v508, 4
    %v531 = vsel %vm527, %v511, %v514
    %v532 = vsel %vm530, %v520, 2102212464
    %v533 = vsel %vm529, %v517, %v532
    %v534 = vsel %vm528, %v531, %v533
    %v535 = vsel %vm527, %v514, %v517
    %v536 = vsel %vm530, %v523, 920167782
    %v537 = vsel %vm529, %v520, %v536
    %v538 = vsel %vm528, %v535, %v537
    %v539 = vsel %vm527, %v517, %v520
    %v540 = vsel %vm530, %v526, 1326507024
    %v541 = vsel %vm529, %v523, %v540
    %v542 = vsel %vm528, %v539, %v541
    %v543 = vshll.u32 %v503, 8
    %v544 = vmul.u32.u64.compose %v543, %v542
    %v545 = vextract.low.u32 %v544
    %v546 = vextract.high.u32 %v544
    %v547 = vmul.u32.u64.compose %v543, %v538
    %v548 = vextract.low.u32 %v547
    %v549 = vextract.high.u32 %v547
    %v550 = vmul.u32 %v543, %v534
    %v551 = vadd.s32 %v546, %v548
    %vm552 = vc.u32 %v546, %v548
    %v553 = vadd.s32 %v549, 1
    %v554 = vsel %vm552, %v553, %v549
    %v555 = vadd.s32 %v550, %v554
    %v556 = vadd.s32 %v555, 536870912
    %v557 = vshrl.u32 %v556, 30
    %v558 = vshll.u32 %v557, 30
    %v559 = vsub.s32 %v555, %v558
    %vm560 = vcmp.lt.s32.totalorder %v559, 0
    %v561 = vsub.s32 0, %v559
    %v562 = vsel %vm560, %v561, %v559
    %v563 = vclz %v562
    %v564 = vsub.s32 %v563, 2
    %vm565 = vcmp.gt.s32.totalorder 0, %v564
    %v566 = vsel %vm565, 0, %v564
    %v567 = vsub.s32 32, %v566
    %v568 = vshll.u32 %v559, %v566
    %v569 = vshrl.u32 %v551, %v567
    %v570 = vor.u32 %v568, %v569
    %v571 = vsub.s32 4294967266, %v566
    %v572 = vadd.s32 %v571, 127
    %v573 = vshll.u32 %v572, 23
    %v574 = vor.u32 4788187, %v573
    %v575 = vand.u32 2147483647, %v574
    %v577 = vcvt.s32.f32 %v570
    %v578 = vmul.f32 %v577, %v575
    %v579 = vxor.u32 %v578, 2147483648
    %v580 = vsel %vm497, %v579, %v578
    %v581 = vsub.s32 4, %v557
    %v582 = vsel %vm497, %v581, %v557
    %v583 = vsel %vm496, %v493, %v580
    %v584 = vsel %vm496, 0, %v582
    %v585 = vcosq.f32.pop %v583
    %v586 = vsinq.f32.pop %v583
    %vm587 = vweird.f32 %v493
    %v588 = vadd.s32 %v584, 3
    %v589 = vand.u32 %v588, 3
    %vm590 = vcmp.lt.s32.totalorder %v589, 2
    %vm591 = vcmp.eq.s32.totalorder %v589, 0
    %v592 = vxor.u32 %v586, 2147483648
    %v593 = vsel %vm591, %v585, %v592
    %vm594 = vcmp.eq.s32.totalorder %v589, 2
    %v595 = vxor.u32 %v585, 2147483648
    %v596 = vsel %vm594, %v595, %v586
    %v597 = vsel %vm590, %v593, %v596
    %v598 = vsel %vm587, nan, %v597
    %v599 = vand.u32 2147483647, %v494
    %vm600 = vcmp.le.f32.partialorder %v599, 0.7853982
    %vm601 = vcmp.lt.s32.totalorder %v494, 0
    %v602 = vand.u32 %v494, 2139095040
    %v603 = vshrl.u32 %v602, 23
    %v604 = vsub.s32 %v603, 127
    %v605 = vand.u32 2147483647, %v494
    %v606 = vand.u32 %v605, 8388607
    %v607 = vor.u32 %v606, 8388608
    %v608 = vsub.s32 0, %v607
    %v609 = vadd.s32 %v604, 1
    %vm610 = vcmp.gt.s32.totalorder %v609, 0
    %v611 = vsel %vm610, %v609, 0
    %v612 = vshrl.u32 %v611, 5
    %v613 = vand.u32 %v611, 31
    %v614 = vsub.s32 32, %v613
    %v615 = vshrl.u32 683565275, %v614
    %v616 = vshll.u32 683565275, %v613
    %v617 = vshrl.u32 2475754826, %v614
    %v618 = vor.u32 %v616, %v617
    %v619 = vshll.u32 2475754826, %v613
    %v620 = vshrl.u32 2131351028, %v614
    %v621 = vor.u32 %v619, %v620
    %v622 = vshll.u32 2131351028, %v613
    %v623 = vshrl.u32 2102212464, %v614
    %v624 = vor.u32 %v622, %v623
    %v625 = vshll.u32 2102212464, %v613
    %v626 = vshrl.u32 920167782, %v614
    %v627 = vor.u32 %v625, %v626
    %v628 = vshll.u32 920167782, %v613
    %v629 = vshrl.u32 1326507024, %v614
    %v630 = vor.u32 %v628, %v629
    %vm631 = vcmp.lt.s32.totalorder %v612, 1
    %vm632 = vcmp.lt.s32.totalorder %v612, 2
    %vm633 = vcmp.lt.s32.totalorder %v612, 3
    %vm634 = vcmp.lt.s32.totalorder %v612, 4
    %v635 = vsel %vm631, %v615, %v618
    %v636 = vsel %vm634, %v624, 2102212464
    %v637 = vsel %vm633, %v621, %v636
    %v638 = vsel %vm632, %v635, %v637
    %v639 = vsel %vm631, %v618, %v621
    %v640 = vsel %vm634, %v627, 920167782
    %v641 = vsel %vm633, %v624, %v640
    %v642 = vsel %vm632, %v639, %v641
    %v643 = vsel %vm631, %v621, %v624
    %v644 = vsel %vm634, %v630, 1326507024
    %v645 = vsel %vm633, %v627, %v644
    %v646 = vsel %vm632, %v643, %v645
    %v647 = vshll.u32 %v607, 8
    %v648 = vmul.u32.u64.compose %v647, %v646
    %v649 = vextract.low.u32 %v648
    %v650 = vextract.high.u32 %v648
    %v651 = vmul.u32.u64.compose %v647, %v642
    %v652 = vextract.low.u32 %v651
    %v653 = vextract.high.u32 %v651
    %v654 = vmul.u32 %v647, %v638
    %v655 = vadd.s32 %v650, %v652
    %vm656 = vc.u32 %v650, %v652
    %v657 = vadd.s32 %v653, 1
    %v658 = vsel %vm656, %v657, %v653
    %v659 = vadd.s32 %v654, %v658
    %v660 = vadd.s32 %v659, 536870912
    %v661 = vshrl.u32 %v660, 30
    %v662 = vshll.u32 %v661, 30
    %v663 = vsub.s32 %v659, %v662
    %vm664 = vcmp.lt.s32.totalorder %v663, 0
    %v665 = vsub.s32 0, %v663
    %v666 = vsel %vm664, %v665, %v663
    %v667 = vclz %v666
    %v668 = vsub.s32 %v667, 2
    %vm669 = vcmp.gt.s32.totalorder 0, %v668
    %v670 = vsel %vm669, 0, %v668
    %v671 = vsub.s32 32, %v670
    %v672 = vshll.u32 %v663, %v670
    %v673 = vshrl.u32 %v655, %v671
    %v674 = vor.u32 %v672, %v673
    %v675 = vsub.s32 4294967266, %v670
    %v676 = vadd.s32 %v675, 127
    %v677 = vshll.u32 %v676, 23
    %v678 = vor.u32 4788187, %v677
    %v679 = vand.u32 2147483647, %v678
    %v681 = vcvt.s32.f32 %v674
    %v682 = vmul.f32 %v681, %v679
    %v683 = vxor.u32 %v682, 2147483648
    %v684 = vsel %vm601, %v683, %v682
    %v685 = vsub.s32 4, %v661
    %v686 = vsel %vm601, %v685, %v661
    %v687 = vsel %vm600, %v494, %v684
    %v688 = vsel %vm600, 0, %v686
    %v689 = vcosq.f32.pop %v687
    %v690 = vsinq.f32.pop %v687
    %vm691 = vweird.f32 %v494
    %v692 = vadd.s32 %v688, 3
    %v693 = vand.u32 %v692, 3
    %vm694 = vcmp.lt.s32.totalorder %v693, 2
    %vm695 = vcmp.eq.s32.totalorder %v693, 0
    %v696 = vxor.u32 %v690, 2147483648
    %v697 = vsel %vm695, %v689, %v696
    %vm698 = vcmp.eq.s32.totalorder %v693, 2
    %v699 = vxor.u32 %v689, 2147483648
    %v700 = vsel %vm698, %v699, %v690
    %v701 = vsel %vm694, %v697, %v700
    %v702 = vsel %vm691, nan, %v701
    %v705 = vcombine.high %v598, %v598
    %v706 = vcombine.high %v702, %v702
    %v707 = vrot.slane %v598, 7
    %v708 = vrot.slane %v705, 7
    %v709 = vrot.slane %v702, 7
    %v710 = vrot.slane %v706, 7
    %715 = vst [vmem:[#allocation5 + $0x20] sm:$0xe] %v707
    %716 = vst [vmem:[#allocation5 + $0x28] sm:$0xe] %v708
    %717 = vst [vmem:[#allocation5 + $0x30] sm:$0xe] %v709
    %718 = vst [vmem:[#allocation5 + $0x38] sm:$0xe] %v710
    %v719 = vadd.f32 %v491, 1.5707964
    %v720 = vadd.f32 %v492, 1.5707964
    %v721 = vand.u32 2147483647, %v719
    %vm722 = vcmp.le.f32.partialorder %v721, 0.7853982
    %vm723 = vcmp.lt.s32.totalorder %v719, 0
    %v724 = vand.u32 %v719, 2139095040
    %v725 = vshrl.u32 %v724, 23
    %v726 = vsub.s32 %v725, 127
    %v727 = vand.u32 2147483647, %v719
    %v728 = vand.u32 %v727, 8388607
    %v729 = vor.u32 %v728, 8388608
    %v730 = vsub.s32 0, %v729
    %v731 = vadd.s32 %v726, 1
    %vm732 = vcmp.gt.s32.totalorder %v731, 0
    %v733 = vsel %vm732, %v731, 0
    %v734 = vshrl.u32 %v733, 5
    %v735 = vand.u32 %v733, 31
    %v736 = vsub.s32 32, %v735
    %v737 = vshrl.u32 683565275, %v736
    %v738 = vshll.u32 683565275, %v735
    %v739 = vshrl.u32 2475754826, %v736
    %v740 = vor.u32 %v738, %v739
    %v741 = vshll.u32 2475754826, %v735
    %v742 = vshrl.u32 2131351028, %v736
    %v743 = vor.u32 %v741, %v742
    %v744 = vshll.u32 2131351028, %v735
    %v745 = vshrl.u32 2102212464, %v736
    %v746 = vor.u32 %v744, %v745
    %v747 = vshll.u32 2102212464, %v735
    %v748 = vshrl.u32 920167782, %v736
    %v749 = vor.u32 %v747, %v748
    %v750 = vshll.u32 920167782, %v735
    %v751 = vshrl.u32 1326507024, %v736
    %v752 = vor.u32 %v750, %v751
    %vm753 = vcmp.lt.s32.totalorder %v734, 1
    %vm754 = vcmp.lt.s32.totalorder %v734, 2
    %vm755 = vcmp.lt.s32.totalorder %v734, 3
    %vm756 = vcmp.lt.s32.totalorder %v734, 4
    %v757 = vsel %vm753, %v737, %v740
    %v758 = vsel %vm756, %v746, 2102212464
    %v759 = vsel %vm755, %v743, %v758
    %v760 = vsel %vm754, %v757, %v759
    %v761 = vsel %vm753, %v740, %v743
    %v762 = vsel %vm756, %v749, 920167782
    %v763 = vsel %vm755, %v746, %v762
    %v764 = vsel %vm754, %v761, %v763
    %v765 = vsel %vm753, %v743, %v746
    %v766 = vsel %vm756, %v752, 1326507024
    %v767 = vsel %vm755, %v749, %v766
    %v768 = vsel %vm754, %v765, %v767
    %v769 = vshll.u32 %v729, 8
    %v770 = vmul.u32.u64.compose %v769, %v768
    %v771 = vextract.low.u32 %v770
    %v772 = vextract.high.u32 %v770
    %v773 = vmul.u32.u64.compose %v769, %v764
    %v774 = vextract.low.u32 %v773
    %v775 = vextract.high.u32 %v773
    %v776 = vmul.u32 %v769, %v760
    %v777 = vadd.s32 %v772, %v774
    %vm778 = vc.u32 %v772, %v774
    %v779 = vadd.s32 %v775, 1
    %v780 = vsel %vm778, %v779, %v775
    %v781 = vadd.s32 %v776, %v780
    %v782 = vadd.s32 %v781, 536870912
    %v783 = vshrl.u32 %v782, 30
    %v784 = vshll.u32 %v783, 30
    %v785 = vsub.s32 %v781, %v784
    %vm786 = vcmp.lt.s32.totalorder %v785, 0
    %v787 = vsub.s32 0, %v785
    %v788 = vsel %vm786, %v787, %v785
    %v789 = vclz %v788
    %v790 = vsub.s32 %v789, 2
    %vm791 = vcmp.gt.s32.totalorder 0, %v790
    %v792 = vsel %vm791, 0, %v790
    %v793 = vsub.s32 32, %v792
    %v794 = vshll.u32 %v785, %v792
    %v795 = vshrl.u32 %v777, %v793
    %v796 = vor.u32 %v794, %v795
    %v797 = vsub.s32 4294967266, %v792
    %v798 = vadd.s32 %v797, 127
    %v799 = vshll.u32 %v798, 23
    %v800 = vor.u32 4788187, %v799
    %v801 = vand.u32 2147483647, %v800
    %v803 = vcvt.s32.f32 %v796
    %v804 = vmul.f32 %v803, %v801
    %v805 = vxor.u32 %v804, 2147483648
    %v806 = vsel %vm723, %v805, %v804
    %v807 = vsub.s32 4, %v783
    %v808 = vsel %vm723, %v807, %v783
    %v809 = vsel %vm722, %v719, %v806
    %v810 = vsel %vm722, 0, %v808
    %v811 = vcosq.f32.pop %v809
    %v812 = vsinq.f32.pop %v809
    %vm813 = vweird.f32 %v719
    %v814 = vadd.s32 %v810, 3
    %v815 = vand.u32 %v814, 3
    %vm816 = vcmp.lt.s32.totalorder %v815, 2
    %vm817 = vcmp.eq.s32.totalorder %v815, 0
    %v818 = vxor.u32 %v812, 2147483648
    %v819 = vsel %vm817, %v811, %v818
    %vm820 = vcmp.eq.s32.totalorder %v815, 2
    %v821 = vxor.u32 %v811, 2147483648
    %v822 = vsel %vm820, %v821, %v812
    %v823 = vsel %vm816, %v819, %v822
    %v824 = vsel %vm813, nan, %v823
    %v825 = vand.u32 2147483647, %v720
    %vm826 = vcmp.le.f32.partialorder %v825, 0.7853982
    %vm827 = vcmp.lt.s32.totalorder %v720, 0
    %v828 = vand.u32 %v720, 2139095040
    %v829 = vshrl.u32 %v828, 23
    %v830 = vsub.s32 %v829, 127
    %v831 = vand.u32 2147483647, %v720
    %v832 = vand.u32 %v831, 8388607
    %v833 = vor.u32 %v832, 8388608
    %v834 = vsub.s32 0, %v833
    %v835 = vadd.s32 %v830, 1
    %vm836 = vcmp.gt.s32.totalorder %v835, 0
    %v837 = vsel %vm836, %v835, 0
    %v838 = vshrl.u32 %v837, 5
    %v839 = vand.u32 %v837, 31
    %v840 = vsub.s32 32, %v839
    %v841 = vshrl.u32 683565275, %v840
    %v842 = vshll.u32 683565275, %v839
    %v843 = vshrl.u32 2475754826, %v840
    %v844 = vor.u32 %v842, %v843
    %v845 = vshll.u32 2475754826, %v839
    %v846 = vshrl.u32 2131351028, %v840
    %v847 = vor.u32 %v845, %v846
    %v848 = vshll.u32 2131351028, %v839
    %v849 = vshrl.u32 2102212464, %v840
    %v850 = vor.u32 %v848, %v849
    %v851 = vshll.u32 2102212464, %v839
    %v852 = vshrl.u32 920167782, %v840
    %v853 = vor.u32 %v851, %v852
    %v854 = vshll.u32 920167782, %v839
    %v855 = vshrl.u32 1326507024, %v840
    %v856 = vor.u32 %v854, %v855
    %vm857 = vcmp.lt.s32.totalorder %v838, 1
    %vm858 = vcmp.lt.s32.totalorder %v838, 2
    %vm859 = vcmp.lt.s32.totalorder %v838, 3
    %vm860 = vcmp.lt.s32.totalorder %v838, 4
    %v861 = vsel %vm857, %v841, %v844
    %v862 = vsel %vm860, %v850, 2102212464
    %v863 = vsel %vm859, %v847, %v862
    %v864 = vsel %vm858, %v861, %v863
    %v865 = vsel %vm857, %v844, %v847
    %v866 = vsel %vm860, %v853, 920167782
    %v867 = vsel %vm859, %v850, %v866
    %v868 = vsel %vm858, %v865, %v867
    %v869 = vsel %vm857, %v847, %v850
    %v870 = vsel %vm860, %v856, 1326507024
    %v871 = vsel %vm859, %v853, %v870
    %v872 = vsel %vm858, %v869, %v871
    %v873 = vshll.u32 %v833, 8
    %v874 = vmul.u32.u64.compose %v873, %v872
    %v875 = vextract.low.u32 %v874
    %v876 = vextract.high.u32 %v874
    %v877 = vmul.u32.u64.compose %v873, %v868
    %v878 = vextract.low.u32 %v877
    %v879 = vextract.high.u32 %v877
    %v880 = vmul.u32 %v873, %v864
    %v881 = vadd.s32 %v876, %v878
    %vm882 = vc.u32 %v876, %v878
    %v883 = vadd.s32 %v879, 1
    %v884 = vsel %vm882, %v883, %v879
    %v885 = vadd.s32 %v880, %v884
    %v886 = vadd.s32 %v885, 536870912
    %v887 = vshrl.u32 %v886, 30
    %v888 = vshll.u32 %v887, 30
    %v889 = vsub.s32 %v885, %v888
    %vm890 = vcmp.lt.s32.totalorder %v889, 0
    %v891 = vsub.s32 0, %v889
    %v892 = vsel %vm890, %v891, %v889
    %v893 = vclz %v892
    %v894 = vsub.s32 %v893, 2
    %vm895 = vcmp.gt.s32.totalorder 0, %v894
    %v896 = vsel %vm895, 0, %v894
    %v897 = vsub.s32 32, %v896
    %v898 = vshll.u32 %v889, %v896
    %v899 = vshrl.u32 %v881, %v897
    %v900 = vor.u32 %v898, %v899
    %v901 = vsub.s32 4294967266, %v896
    %v902 = vadd.s32 %v901, 127
    %v903 = vshll.u32 %v902, 23
    %v904 = vor.u32 4788187, %v903
    %v905 = vand.u32 2147483647, %v904
    %v907 = vcvt.s32.f32 %v900
    %v908 = vmul.f32 %v907, %v905
    %v909 = vxor.u32 %v908, 2147483648
    %v910 = vsel %vm827, %v909, %v908
    %v911 = vsub.s32 4, %v887
    %v912 = vsel %vm827, %v911, %v887
    %v913 = vsel %vm826, %v720, %v910
    %v914 = vsel %vm826, 0, %v912
    %v915 = vcosq.f32.pop %v913
    %v916 = vsinq.f32.pop %v913
    %vm917 = vweird.f32 %v720
    %v918 = vadd.s32 %v914, 3
    %v919 = vand.u32 %v918, 3
    %vm920 = vcmp.lt.s32.totalorder %v919, 2
    %vm921 = vcmp.eq.s32.totalorder %v919, 0
    %v922 = vxor.u32 %v916, 2147483648
    %v923 = vsel %vm921, %v915, %v922
    %vm924 = vcmp.eq.s32.totalorder %v919, 2
    %v925 = vxor.u32 %v915, 2147483648
    %v926 = vsel %vm924, %v925, %v916
    %v927 = vsel %vm920, %v923, %v926
    %v928 = vsel %vm917, nan, %v927
    %v931 = vcombine.low %v824, %v824
    %v932 = vcombine.low %v928, %v928
    %935 = vst [vmem:[#allocation5 + $0x20] sm:$0x70] %v931
    %936 = vst [vmem:[#allocation5 + $0x28] sm:$0x70] %v824
    %937 = vst [vmem:[#allocation5 + $0x30] sm:$0x70] %v932
    %938 = vst [vmem:[#allocation5 + $0x38] sm:$0x70] %v928
    %v939 = vmul.f32 %v21, 12.566371
    %v940 = vmul.f32 %v22, 12.566371
    %v941 = vadd.f32 %v939, 0.0
    %v942 = vadd.f32 %v940, 0.0
    %v943 = vand.u32 2147483647, %v941
    %vm944 = vcmp.le.f32.partialorder %v943, 0.7853982
    %vm945 = vcmp.lt.s32.totalorder %v941, 0
    %v946 = vand.u32 %v941, 2139095040
    %v947 = vshrl.u32 %v946, 23
    %v948 = vsub.s32 %v947, 127
    %v949 = vand.u32 2147483647, %v941
    %v950 = vand.u32 %v949, 8388607
    %v951 = vor.u32 %v950, 8388608
    %v952 = vsub.s32 0, %v951
    %v953 = vadd.s32 %v948, 1
    %vm954 = vcmp.gt.s32.totalorder %v953, 0
    %v955 = vsel %vm954, %v953, 0
    %v956 = vshrl.u32 %v955, 5
    %v957 = vand.u32 %v955, 31
    %v958 = vsub.s32 32, %v957
    %v959 = vshrl.u32 683565275, %v958
    %v960 = vshll.u32 683565275, %v957
    %v961 = vshrl.u32 2475754826, %v958
    %v962 = vor.u32 %v960, %v961
    %v963 = vshll.u32 2475754826, %v957
    %v964 = vshrl.u32 2131351028, %v958
    %v965 = vor.u32 %v963, %v964
    %v966 = vshll.u32 2131351028, %v957
    %v967 = vshrl.u32 2102212464, %v958
    %v968 = vor.u32 %v966, %v967
    %v969 = vshll.u32 2102212464, %v957
    %v970 = vshrl.u32 920167782, %v958
    %v971 = vor.u32 %v969, %v970
    %v972 = vshll.u32 920167782, %v957
    %v973 = vshrl.u32 1326507024, %v958
    %v974 = vor.u32 %v972, %v973
    %vm975 = vcmp.lt.s32.totalorder %v956, 1
    %vm976 = vcmp.lt.s32.totalorder %v956, 2
    %vm977 = vcmp.lt.s32.totalorder %v956, 3
    %vm978 = vcmp.lt.s32.totalorder %v956, 4
    %v979 = vsel %vm975, %v959, %v962
    %v980 = vsel %vm978, %v968, 2102212464
    %v981 = vsel %vm977, %v965, %v980
    %v982 = vsel %vm976, %v979, %v981
    %v983 = vsel %vm975, %v962, %v965
    %v984 = vsel %vm978, %v971, 920167782
    %v985 = vsel %vm977, %v968, %v984
    %v986 = vsel %vm976, %v983, %v985
    %v987 = vsel %vm975, %v965, %v968
    %v988 = vsel %vm978, %v974, 1326507024
    %v989 = vsel %vm977, %v971, %v988
    %v990 = vsel %vm976, %v987, %v989
    %v991 = vshll.u32 %v951, 8
    %v992 = vmul.u32.u64.compose %v991, %v990
    %v993 = vextract.low.u32 %v992
    %v994 = vextract.high.u32 %v992
    %v995 = vmul.u32.u64.compose %v991, %v986
    %v996 = vextract.low.u32 %v995
    %v997 = vextract.high.u32 %v995
    %v998 = vmul.u32 %v991, %v982
    %v999 = vadd.s32 %v994, %v996
    %vm1000 = vc.u32 %v994, %v996
    %v1001 = vadd.s32 %v997, 1
    %v1002 = vsel %vm1000, %v1001, %v997
    %v1003 = vadd.s32 %v998, %v1002
    %v1004 = vadd.s32 %v1003, 536870912
    %v1005 = vshrl.u32 %v1004, 30
    %v1006 = vshll.u32 %v1005, 30
    %v1007 = vsub.s32 %v1003, %v1006
    %vm1008 = vcmp.lt.s32.totalorder %v1007, 0
    %v1009 = vsub.s32 0, %v1007
    %v1010 = vsel %vm1008, %v1009, %v1007
    %v1011 = vclz %v1010
    %v1012 = vsub.s32 %v1011, 2
    %vm1013 = vcmp.gt.s32.totalorder 0, %v1012
    %v1014 = vsel %vm1013, 0, %v1012
    %v1015 = vsub.s32 32, %v1014
    %v1016 = vshll.u32 %v1007, %v1014
    %v1017 = vshrl.u32 %v999, %v1015
    %v1018 = vor.u32 %v1016, %v1017
    %v1019 = vsub.s32 4294967266, %v1014
    %v1020 = vadd.s32 %v1019, 127
    %v1021 = vshll.u32 %v1020, 23
    %v1022 = vor.u32 4788187, %v1021
    %v1023 = vand.u32 2147483647, %v1022
    %v1025 = vcvt.s32.f32 %v1018
    %v1026 = vmul.f32 %v1025, %v1023
    %v1027 = vxor.u32 %v1026, 2147483648
    %v1028 = vsel %vm945, %v1027, %v1026
    %v1029 = vsub.s32 4, %v1005
    %v1030 = vsel %vm945, %v1029, %v1005
    %v1031 = vsel %vm944, %v941, %v1028
    %v1032 = vsel %vm944, 0, %v1030
    %v1033 = vcosq.f32.pop %v1031
    %v1034 = vsinq.f32.pop %v1031
    %vm1035 = vweird.f32 %v941
    %v1036 = vadd.s32 %v1032, 3
    %v1037 = vand.u32 %v1036, 3
    %vm1038 = vcmp.lt.s32.totalorder %v1037, 2
    %vm1039 = vcmp.eq.s32.totalorder %v1037, 0
    %v1040 = vxor.u32 %v1034, 2147483648
    %v1041 = vsel %vm1039, %v1033, %v1040
    %vm1042 = vcmp.eq.s32.totalorder %v1037, 2
    %v1043 = vxor.u32 %v1033, 2147483648
    %v1044 = vsel %vm1042, %v1043, %v1034
    %v1045 = vsel %vm1038, %v1041, %v1044
    %v1046 = vsel %vm1035, nan, %v1045
    %v1047 = vand.u32 2147483647, %v942
    %vm1048 = vcmp.le.f32.partialorder %v1047, 0.7853982
    %vm1049 = vcmp.lt.s32.totalorder %v942, 0
    %v1050 = vand.u32 %v942, 2139095040
    %v1051 = vshrl.u32 %v1050, 23
    %v1052 = vsub.s32 %v1051, 127
    %v1053 = vand.u32 2147483647, %v942
    %v1054 = vand.u32 %v1053, 8388607
    %v1055 = vor.u32 %v1054, 8388608
    %v1056 = vsub.s32 0, %v1055
    %v1057 = vadd.s32 %v1052, 1
    %vm1058 = vcmp.gt.s32.totalorder %v1057, 0
    %v1059 = vsel %vm1058, %v1057, 0
    %v1060 = vshrl.u32 %v1059, 5
    %v1061 = vand.u32 %v1059, 31
    %v1062 = vsub.s32 32, %v1061
    %v1063 = vshrl.u32 683565275, %v1062
    %v1064 = vshll.u32 683565275, %v1061
    %v1065 = vshrl.u32 2475754826, %v1062
    %v1066 = vor.u32 %v1064, %v1065
    %v1067 = vshll.u32 2475754826, %v1061
    %v1068 = vshrl.u32 2131351028, %v1062
    %v1069 = vor.u32 %v1067, %v1068
    %v1070 = vshll.u32 2131351028, %v1061
    %v1071 = vshrl.u32 2102212464, %v1062
    %v1072 = vor.u32 %v1070, %v1071
    %v1073 = vshll.u32 2102212464, %v1061
    %v1074 = vshrl.u32 920167782, %v1062
    %v1075 = vor.u32 %v1073, %v1074
    %v1076 = vshll.u32 920167782, %v1061
    %v1077 = vshrl.u32 1326507024, %v1062
    %v1078 = vor.u32 %v1076, %v1077
    %vm1079 = vcmp.lt.s32.totalorder %v1060, 1
    %vm1080 = vcmp.lt.s32.totalorder %v1060, 2
    %vm1081 = vcmp.lt.s32.totalorder %v1060, 3
    %vm1082 = vcmp.lt.s32.totalorder %v1060, 4
    %v1083 = vsel %vm1079, %v1063, %v1066
    %v1084 = vsel %vm1082, %v1072, 2102212464
    %v1085 = vsel %vm1081, %v1069, %v1084
    %v1086 = vsel %vm1080, %v1083, %v1085
    %v1087 = vsel %vm1079, %v1066, %v1069
    %v1088 = vsel %vm1082, %v1075, 920167782
    %v1089 = vsel %vm1081, %v1072, %v1088
    %v1090 = vsel %vm1080, %v1087, %v1089
    %v1091 = vsel %vm1079, %v1069, %v1072
    %v1092 = vsel %vm1082, %v1078, 1326507024
    %v1093 = vsel %vm1081, %v1075, %v1092
    %v1094 = vsel %vm1080, %v1091, %v1093
    %v1095 = vshll.u32 %v1055, 8
    %v1096 = vmul.u32.u64.compose %v1095, %v1094
    %v1097 = vextract.low.u32 %v1096
    %v1098 = vextract.high.u32 %v1096
    %v1099 = vmul.u32.u64.compose %v1095, %v1090
    %v1100 = vextract.low.u32 %v1099
    %v1101 = vextract.high.u32 %v1099
    %v1102 = vmul.u32 %v1095, %v1086
    %v1103 = vadd.s32 %v1098, %v1100
    %vm1104 = vc.u32 %v1098, %v1100
    %v1105 = vadd.s32 %v1101, 1
    %v1106 = vsel %vm1104, %v1105, %v1101
    %v1107 = vadd.s32 %v1102, %v1106
    %v1108 = vadd.s32 %v1107, 536870912
    %v1109 = vshrl.u32 %v1108, 30
    %v1110 = vshll.u32 %v1109, 30
    %v1111 = vsub.s32 %v1107, %v1110
    %vm1112 = vcmp.lt.s32.totalorder %v1111, 0
    %v1113 = vsub.s32 0, %v1111
    %v1114 = vsel %vm1112, %v1113, %v1111
    %v1115 = vclz %v1114
    %v1116 = vsub.s32 %v1115, 2
    %vm1117 = vcmp.gt.s32.totalorder 0, %v1116
    %v1118 = vsel %vm1117, 0, %v1116
    %v1119 = vsub.s32 32, %v1118
    %v1120 = vshll.u32 %v1111, %v1118
    %v1121 = vshrl.u32 %v1103, %v1119
    %v1122 = vor.u32 %v1120, %v1121
    %v1123 = vsub.s32 4294967266, %v1118
    %v1124 = vadd.s32 %v1123, 127
    %v1125 = vshll.u32 %v1124, 23
    %v1126 = vor.u32 4788187, %v1125
    %v1127 = vand.u32 2147483647, %v1126
    %v1129 = vcvt.s32.f32 %v1122
    %v1130 = vmul.f32 %v1129, %v1127
    %v1131 = vxor.u32 %v1130, 2147483648
    %v1132 = vsel %vm1049, %v1131, %v1130
    %v1133 = vsub.s32 4, %v1109
    %v1134 = vsel %vm1049, %v1133, %v1109
    %v1135 = vsel %vm1048, %v942, %v1132
    %v1136 = vsel %vm1048, 0, %v1134
    %v1137 = vcosq.f32.pop %v1135
    %v1138 = vsinq.f32.pop %v1135
    %vm1139 = vweird.f32 %v942
    %v1140 = vadd.s32 %v1136, 3
    %v1141 = vand.u32 %v1140, 3
    %vm1142 = vcmp.lt.s32.totalorder %v1141, 2
    %vm1143 = vcmp.eq.s32.totalorder %v1141, 0
    %v1144 = vxor.u32 %v1138, 2147483648
    %v1145 = vsel %vm1143, %v1137, %v1144
    %vm1146 = vcmp.eq.s32.totalorder %v1141, 2
    %v1147 = vxor.u32 %v1137, 2147483648
    %v1148 = vsel %vm1146, %v1147, %v1138
    %v1149 = vsel %vm1142, %v1145, %v1148
    %v1150 = vsel %vm1139, nan, %v1149
    %v1153 = vcombine.high %v1046, %v1046
    %v1154 = vcombine.high %v1150, %v1150
    %v1155 = vrot.slane %v1046, 1
    %v1156 = vrot.slane %v1153, 1
    %v1157 = vrot.slane %v1150, 1
    %v1158 = vrot.slane %v1154, 1
    %1163 = vst [vmem:[#allocation5 + $0x20] sm:$0x80] %v1155
    %1164 = vst [vmem:[#allocation5 + $0x28] sm:$0x80] %v1156
    %1165 = vst [vmem:[#allocation5 + $0x30] sm:$0x80] %v1157
    %1166 = vst [vmem:[#allocation5 + $0x38] sm:$0x80] %v1158
    %1167 = vst [vmem:[#allocation5 + $0x40] sm:$0x3] %v1155
    %1168 = vst [vmem:[#allocation5 + $0x48] sm:$0x3] %v1156
    %1169 = vst [vmem:[#allocation5 + $0x50] sm:$0x3] %v1157
    %1170 = vst [vmem:[#allocation5 + $0x58] sm:$0x3] %v1158
    %v1171 = vadd.f32 %v939, 1.5707964
    %v1172 = vadd.f32 %v940, 1.5707964
    %v1173 = vand.u32 2147483647, %v1171
    %vm1174 = vcmp.le.f32.partialorder %v1173, 0.7853982
    %vm1175 = vcmp.lt.s32.totalorder %v1171, 0
    %v1176 = vand.u32 %v1171, 2139095040
    %v1177 = vshrl.u32 %v1176, 23
    %v1178 = vsub.s32 %v1177, 127
    %v1179 = vand.u32 2147483647, %v1171
    %v1180 = vand.u32 %v1179, 8388607
    %v1181 = vor.u32 %v1180, 8388608
    %v1182 = vsub.s32 0, %v1181
    %v1183 = vadd.s32 %v1178, 1
    %vm1184 = vcmp.gt.s32.totalorder %v1183, 0
    %v1185 = vsel %vm1184, %v1183, 0
    %v1186 = vshrl.u32 %v1185, 5
    %v1187 = vand.u32 %v1185, 31
    %v1188 = vsub.s32 32, %v1187
    %v1189 = vshrl.u32 683565275, %v1188
    %v1190 = vshll.u32 683565275, %v1187
    %v1191 = vshrl.u32 2475754826, %v1188
    %v1192 = vor.u32 %v1190, %v1191
    %v1193 = vshll.u32 2475754826, %v1187
    %v1194 = vshrl.u32 2131351028, %v1188
    %v1195 = vor.u32 %v1193, %v1194
    %v1196 = vshll.u32 2131351028, %v1187
    %v1197 = vshrl.u32 2102212464, %v1188
    %v1198 = vor.u32 %v1196, %v1197
    %v1199 = vshll.u32 2102212464, %v1187
    %v1200 = vshrl.u32 920167782, %v1188
    %v1201 = vor.u32 %v1199, %v1200
    %v1202 = vshll.u32 920167782, %v1187
    %v1203 = vshrl.u32 1326507024, %v1188
    %v1204 = vor.u32 %v1202, %v1203
    %vm1205 = vcmp.lt.s32.totalorder %v1186, 1
    %vm1206 = vcmp.lt.s32.totalorder %v1186, 2
    %vm1207 = vcmp.lt.s32.totalorder %v1186, 3
    %vm1208 = vcmp.lt.s32.totalorder %v1186, 4
    %v1209 = vsel %vm1205, %v1189, %v1192
    %v1210 = vsel %vm1208, %v1198, 2102212464
    %v1211 = vsel %vm1207, %v1195, %v1210
    %v1212 = vsel %vm1206, %v1209, %v1211
    %v1213 = vsel %vm1205, %v1192, %v1195
    %v1214 = vsel %vm1208, %v1201, 920167782
    %v1215 = vsel %vm1207, %v1198, %v1214
    %v1216 = vsel %vm1206, %v1213, %v1215
    %v1217 = vsel %vm1205, %v1195, %v1198
    %v1218 = vsel %vm1208, %v1204, 1326507024
    %v1219 = vsel %vm1207, %v1201, %v1218
    %v1220 = vsel %vm1206, %v1217, %v1219
    %v1221 = vshll.u32 %v1181, 8
    %v1222 = vmul.u32.u64.compose %v1221, %v1220
    %v1223 = vextract.low.u32 %v1222
    %v1224 = vextract.high.u32 %v1222
    %v1225 = vmul.u32.u64.compose %v1221, %v1216
    %v1226 = vextract.low.u32 %v1225
    %v1227 = vextract.high.u32 %v1225
    %v1228 = vmul.u32 %v1221, %v1212
    %v1229 = vadd.s32 %v1224, %v1226
    %vm1230 = vc.u32 %v1224, %v1226
    %v1231 = vadd.s32 %v1227, 1
    %v1232 = vsel %vm1230, %v1231, %v1227
    %v1233 = vadd.s32 %v1228, %v1232
    %v1234 = vadd.s32 %v1233, 536870912
    %v1235 = vshrl.u32 %v1234, 30
    %v1236 = vshll.u32 %v1235, 30
    %v1237 = vsub.s32 %v1233, %v1236
    %vm1238 = vcmp.lt.s32.totalorder %v1237, 0
    %v1239 = vsub.s32 0, %v1237
    %v1240 = vsel %vm1238, %v1239, %v1237
    %v1241 = vclz %v1240
    %v1242 = vsub.s32 %v1241, 2
    %vm1243 = vcmp.gt.s32.totalorder 0, %v1242
    %v1244 = vsel %vm1243, 0, %v1242
    %v1245 = vsub.s32 32, %v1244
    %v1246 = vshll.u32 %v1237, %v1244
    %v1247 = vshrl.u32 %v1229, %v1245
    %v1248 = vor.u32 %v1246, %v1247
    %v1249 = vsub.s32 4294967266, %v1244
    %v1250 = vadd.s32 %v1249, 127
    %v1251 = vshll.u32 %v1250, 23
    %v1252 = vor.u32 4788187, %v1251
    %v1253 = vand.u32 2147483647, %v1252
    %v1255 = vcvt.s32.f32 %v1248
    %v1256 = vmul.f32 %v1255, %v1253
    %v1257 = vxor.u32 %v1256, 2147483648
    %v1258 = vsel %vm1175, %v1257, %v1256
    %v1259 = vsub.s32 4, %v1235
    %v1260 = vsel %vm1175, %v1259, %v1235
    %v1261 = vsel %vm1174, %v1171, %v1258
    %v1262 = vsel %vm1174, 0, %v1260
    %v1263 = vcosq.f32.pop %v1261
    %v1264 = vsinq.f32.pop %v1261
    %vm1265 = vweird.f32 %v1171
    %v1266 = vadd.s32 %v1262, 3
    %v1267 = vand.u32 %v1266, 3
    %vm1268 = vcmp.lt.s32.totalorder %v1267, 2
    %vm1269 = vcmp.eq.s32.totalorder %v1267, 0
    %v1270 = vxor.u32 %v1264, 2147483648
    %v1271 = vsel %vm1269, %v1263, %v1270
    %vm1272 = vcmp.eq.s32.totalorder %v1267, 2
    %v1273 = vxor.u32 %v1263, 2147483648
    %v1274 = vsel %vm1272, %v1273, %v1264
    %v1275 = vsel %vm1268, %v1271, %v1274
    %v1276 = vsel %vm1265, nan, %v1275
    %v1277 = vand.u32 2147483647, %v1172
    %vm1278 = vcmp.le.f32.partialorder %v1277, 0.7853982
    %vm1279 = vcmp.lt.s32.totalorder %v1172, 0
    %v1280 = vand.u32 %v1172, 2139095040
    %v1281 = vshrl.u32 %v1280, 23
    %v1282 = vsub.s32 %v1281, 127
    %v1283 = vand.u32 2147483647, %v1172
    %v1284 = vand.u32 %v1283, 8388607
    %v1285 = vor.u32 %v1284, 8388608
    %v1286 = vsub.s32 0, %v1285
    %v1287 = vadd.s32 %v1282, 1
    %vm1288 = vcmp.gt.s32.totalorder %v1287, 0
    %v1289 = vsel %vm1288, %v1287, 0
    %v1290 = vshrl.u32 %v1289, 5
    %v1291 = vand.u32 %v1289, 31
    %v1292 = vsub.s32 32, %v1291
    %v1293 = vshrl.u32 683565275, %v1292
    %v1294 = vshll.u32 683565275, %v1291
    %v1295 = vshrl.u32 2475754826, %v1292
    %v1296 = vor.u32 %v1294, %v1295
    %v1297 = vshll.u32 2475754826, %v1291
    %v1298 = vshrl.u32 2131351028, %v1292
    %v1299 = vor.u32 %v1297, %v1298
    %v1300 = vshll.u32 2131351028, %v1291
    %v1301 = vshrl.u32 2102212464, %v1292
    %v1302 = vor.u32 %v1300, %v1301
    %v1303 = vshll.u32 2102212464, %v1291
    %v1304 = vshrl.u32 920167782, %v1292
    %v1305 = vor.u32 %v1303, %v1304
    %v1306 = vshll.u32 920167782, %v1291
    %v1307 = vshrl.u32 1326507024, %v1292
    %v1308 = vor.u32 %v1306, %v1307
    %vm1309 = vcmp.lt.s32.totalorder %v1290, 1
    %vm1310 = vcmp.lt.s32.totalorder %v1290, 2
    %vm1311 = vcmp.lt.s32.totalorder %v1290, 3
    %vm1312 = vcmp.lt.s32.totalorder %v1290, 4
    %v1313 = vsel %vm1309, %v1293, %v1296
    %v1314 = vsel %vm1312, %v1302, 2102212464
    %v1315 = vsel %vm1311, %v1299, %v1314
    %v1316 = vsel %vm1310, %v1313, %v1315
    %v1317 = vsel %vm1309, %v1296, %v1299
    %v1318 = vsel %vm1312, %v1305, 920167782
    %v1319 = vsel %vm1311, %v1302, %v1318
    %v1320 = vsel %vm1310, %v1317, %v1319
    %v1321 = vsel %vm1309, %v1299, %v1302
    %v1322 = vsel %vm1312, %v1308, 1326507024
    %v1323 = vsel %vm1311, %v1305, %v1322
    %v1324 = vsel %vm1310, %v1321, %v1323
    %v1325 = vshll.u32 %v1285, 8
    %v1326 = vmul.u32.u64.compose %v1325, %v1324
    %v1327 = vextract.low.u32 %v1326
    %v1328 = vextract.high.u32 %v1326
    %v1329 = vmul.u32.u64.compose %v1325, %v1320
    %v1330 = vextract.low.u32 %v1329
    %v1331 = vextract.high.u32 %v1329
    %v1332 = vmul.u32 %v1325, %v1316
    %v1333 = vadd.s32 %v1328, %v1330
    %vm1334 = vc.u32 %v1328, %v1330
    %v1335 = vadd.s32 %v1331, 1
    %v1336 = vsel %vm1334, %v1335, %v1331
    %v1337 = vadd.s32 %v1332, %v1336
    %v1338 = vadd.s32 %v1337, 536870912
    %v1339 = vshrl.u32 %v1338, 30
    %v1340 = vshll.u32 %v1339, 30
    %v1341 = vsub.s32 %v1337, %v1340
    %vm1342 = vcmp.lt.s32.totalorder %v1341, 0
    %v1343 = vsub.s32 0, %v1341
    %v1344 = vsel %vm1342, %v1343, %v1341
    %v1345 = vclz %v1344
    %v1346 = vsub.s32 %v1345, 2
    %vm1347 = vcmp.gt.s32.totalorder 0, %v1346
    %v1348 = vsel %vm1347, 0, %v1346
    %v1349 = vsub.s32 32, %v1348
    %v1350 = vshll.u32 %v1341, %v1348
    %v1351 = vshrl.u32 %v1333, %v1349
    %v1352 = vor.u32 %v1350, %v1351
    %v1353 = vsub.s32 4294967266, %v1348
    %v1354 = vadd.s32 %v1353, 127
    %v1355 = vshll.u32 %v1354, 23
    %v1356 = vor.u32 4788187, %v1355
    %v1357 = vand.u32 2147483647, %v1356
    %v1359 = vcvt.s32.f32 %v1352
    %v1360 = vmul.f32 %v1359, %v1357
    %v1361 = vxor.u32 %v1360, 2147483648
    %v1362 = vsel %vm1279, %v1361, %v1360
    %v1363 = vsub.s32 4, %v1339
    %v1364 = vsel %vm1279, %v1363, %v1339
    %v1365 = vsel %vm1278, %v1172, %v1362
    %v1366 = vsel %vm1278, 0, %v1364
    %v1367 = vcosq.f32.pop %v1365
    %v1368 = vsinq.f32.pop %v1365
    %vm1369 = vweird.f32 %v1172
    %v1370 = vadd.s32 %v1366, 3
    %v1371 = vand.u32 %v1370, 3
    %vm1372 = vcmp.lt.s32.totalorder %v1371, 2
    %vm1373 = vcmp.eq.s32.totalorder %v1371, 0
    %v1374 = vxor.u32 %v1368, 2147483648
    %v1375 = vsel %vm1373, %v1367, %v1374
    %vm1376 = vcmp.eq.s32.totalorder %v1371, 2
    %v1377 = vxor.u32 %v1367, 2147483648
    %v1378 = vsel %vm1376, %v1377, %v1368
    %v1379 = vsel %vm1372, %v1375, %v1378
    %v1380 = vsel %vm1369, nan, %v1379
    %v1383 = vcombine.high %v1276, %v1276
    %v1384 = vcombine.high %v1380, %v1380
    %v1385 = vrot.slane %v1276, 6
    %v1386 = vrot.slane %v1383, 6
    %v1387 = vrot.slane %v1380, 6
    %v1388 = vrot.slane %v1384, 6
    %1393 = vst [vmem:[#allocation5 + $0x40] sm:$0x1c] %v1385
    %1394 = vst [vmem:[#allocation5 + $0x48] sm:$0x1c] %v1386
    %1395 = vst [vmem:[#allocation5 + $0x50] sm:$0x1c] %v1387
    %1396 = vst [vmem:[#allocation5 + $0x58] sm:$0x1c] %v1388
    %v1397 = vmul.f32 %v21, 25.132742
    %v1398 = vmul.f32 %v22, 25.132742
    %v1399 = vadd.f32 %v1397, 0.0
    %v1400 = vadd.f32 %v1398, 0.0
    %v1401 = vand.u32 2147483647, %v1399
    %vm1402 = vcmp.le.f32.partialorder %v1401, 0.7853982
    %vm1403 = vcmp.lt.s32.totalorder %v1399, 0
    %v1404 = vand.u32 %v1399, 2139095040
    %v1405 = vshrl.u32 %v1404, 23
    %v1406 = vsub.s32 %v1405, 127
    %v1407 = vand.u32 2147483647, %v1399
    %v1408 = vand.u32 %v1407, 8388607
    %v1409 = vor.u32 %v1408, 8388608
    %v1410 = vsub.s32 0, %v1409
    %v1411 = vadd.s32 %v1406, 1
    %vm1412 = vcmp.gt.s32.totalorder %v1411, 0
    %v1413 = vsel %vm1412, %v1411, 0
    %v1414 = vshrl.u32 %v1413, 5
    %v1415 = vand.u32 %v1413, 31
    %v1416 = vsub.s32 32, %v1415
    %v1417 = vshrl.u32 683565275, %v1416
    %v1418 = vshll.u32 683565275, %v1415
    %v1419 = vshrl.u32 2475754826, %v1416
    %v1420 = vor.u32 %v1418, %v1419
    %v1421 = vshll.u32 2475754826, %v1415
    %v1422 = vshrl.u32 2131351028, %v1416
    %v1423 = vor.u32 %v1421, %v1422
    %v1424 = vshll.u32 2131351028, %v1415
    %v1425 = vshrl.u32 2102212464, %v1416
    %v1426 = vor.u32 %v1424, %v1425
    %v1427 = vshll.u32 2102212464, %v1415
    %v1428 = vshrl.u32 920167782, %v1416
    %v1429 = vor.u32 %v1427, %v1428
    %v1430 = vshll.u32 920167782, %v1415
    %v1431 = vshrl.u32 1326507024, %v1416
    %v1432 = vor.u32 %v1430, %v1431
    %vm1433 = vcmp.lt.s32.totalorder %v1414, 1
    %vm1434 = vcmp.lt.s32.totalorder %v1414, 2
    %vm1435 = vcmp.lt.s32.totalorder %v1414, 3
    %vm1436 = vcmp.lt.s32.totalorder %v1414, 4
    %v1437 = vsel %vm1433, %v1417, %v1420
    %v1438 = vsel %vm1436, %v1426, 2102212464
    %v1439 = vsel %vm1435, %v1423, %v1438
    %v1440 = vsel %vm1434, %v1437, %v1439
    %v1441 = vsel %vm1433, %v1420, %v1423
    %v1442 = vsel %vm1436, %v1429, 920167782
    %v1443 = vsel %vm1435, %v1426, %v1442
    %v1444 = vsel %vm1434, %v1441, %v1443
    %v1445 = vsel %vm1433, %v1423, %v1426
    %v1446 = vsel %vm1436, %v1432, 1326507024
    %v1447 = vsel %vm1435, %v1429, %v1446
    %v1448 = vsel %vm1434, %v1445, %v1447
    %v1449 = vshll.u32 %v1409, 8
    %v1450 = vmul.u32.u64.compose %v1449, %v1448
    %v1451 = vextract.low.u32 %v1450
    %v1452 = vextract.high.u32 %v1450
    %v1453 = vmul.u32.u64.compose %v1449, %v1444
    %v1454 = vextract.low.u32 %v1453
    %v1455 = vextract.high.u32 %v1453
    %v1456 = vmul.u32 %v1449, %v1440
    %v1457 = vadd.s32 %v1452, %v1454
    %vm1458 = vc.u32 %v1452, %v1454
    %v1459 = vadd.s32 %v1455, 1
    %v1460 = vsel %vm1458, %v1459, %v1455
    %v1461 = vadd.s32 %v1456, %v1460
    %v1462 = vadd.s32 %v1461, 536870912
    %v1463 = vshrl.u32 %v1462, 30
    %v1464 = vshll.u32 %v1463, 30
    %v1465 = vsub.s32 %v1461, %v1464
    %vm1466 = vcmp.lt.s32.totalorder %v1465, 0
    %v1467 = vsub.s32 0, %v1465
    %v1468 = vsel %vm1466, %v1467, %v1465
    %v1469 = vclz %v1468
    %v1470 = vsub.s32 %v1469, 2
    %vm1471 = vcmp.gt.s32.totalorder 0, %v1470
    %v1472 = vsel %vm1471, 0, %v1470
    %v1473 = vsub.s32 32, %v1472
    %v1474 = vshll.u32 %v1465, %v1472
    %v1475 = vshrl.u32 %v1457, %v1473
    %v1476 = vor.u32 %v1474, %v1475
    %v1477 = vsub.s32 4294967266, %v1472
    %v1478 = vadd.s32 %v1477, 127
    %v1479 = vshll.u32 %v1478, 23
    %v1480 = vor.u32 4788187, %v1479
    %v1481 = vand.u32 2147483647, %v1480
    %v1483 = vcvt.s32.f32 %v1476
    %v1484 = vmul.f32 %v1483, %v1481
    %v1485 = vxor.u32 %v1484, 2147483648
    %v1486 = vsel %vm1403, %v1485, %v1484
    %v1487 = vsub.s32 4, %v1463
    %v1488 = vsel %vm1403, %v1487, %v1463
    %v1489 = vsel %vm1402, %v1399, %v1486
    %v1490 = vsel %vm1402, 0, %v1488
    %v1491 = vcosq.f32.pop %v1489
    %v1492 = vsinq.f32.pop %v1489
    %vm1493 = vweird.f32 %v1399
    %v1494 = vadd.s32 %v1490, 3
    %v1495 = vand.u32 %v1494, 3
    %vm1496 = vcmp.lt.s32.totalorder %v1495, 2
    %vm1497 = vcmp.eq.s32.totalorder %v1495, 0
    %v1498 = vxor.u32 %v1492, 2147483648
    %v1499 = vsel %vm1497, %v1491, %v1498
    %vm1500 = vcmp.eq.s32.totalorder %v1495, 2
    %v1501 = vxor.u32 %v1491, 2147483648
    %v1502 = vsel %vm1500, %v1501, %v1492
    %v1503 = vsel %vm1496, %v1499, %v1502
    %v1504 = vsel %vm1493, nan, %v1503
    %v1505 = vand.u32 2147483647, %v1400
    %vm1506 = vcmp.le.f32.partialorder %v1505, 0.7853982
    %vm1507 = vcmp.lt.s32.totalorder %v1400, 0
    %v1508 = vand.u32 %v1400, 2139095040
    %v1509 = vshrl.u32 %v1508, 23
    %v1510 = vsub.s32 %v1509, 127
    %v1511 = vand.u32 2147483647, %v1400
    %v1512 = vand.u32 %v1511, 8388607
    %v1513 = vor.u32 %v1512, 8388608
    %v1514 = vsub.s32 0, %v1513
    %v1515 = vadd.s32 %v1510, 1
    %vm1516 = vcmp.gt.s32.totalorder %v1515, 0
    %v1517 = vsel %vm1516, %v1515, 0
    %v1518 = vshrl.u32 %v1517, 5
    %v1519 = vand.u32 %v1517, 31
    %v1520 = vsub.s32 32, %v1519
    %v1521 = vshrl.u32 683565275, %v1520
    %v1522 = vshll.u32 683565275, %v1519
    %v1523 = vshrl.u32 2475754826, %v1520
    %v1524 = vor.u32 %v1522, %v1523
    %v1525 = vshll.u32 2475754826, %v1519
    %v1526 = vshrl.u32 2131351028, %v1520
    %v1527 = vor.u32 %v1525, %v1526
    %v1528 = vshll.u32 2131351028, %v1519
    %v1529 = vshrl.u32 2102212464, %v1520
    %v1530 = vor.u32 %v1528, %v1529
    %v1531 = vshll.u32 2102212464, %v1519
    %v1532 = vshrl.u32 920167782, %v1520
    %v1533 = vor.u32 %v1531, %v1532
    %v1534 = vshll.u32 920167782, %v1519
    %v1535 = vshrl.u32 1326507024, %v1520
    %v1536 = vor.u32 %v1534, %v1535
    %vm1537 = vcmp.lt.s32.totalorder %v1518, 1
    %vm1538 = vcmp.lt.s32.totalorder %v1518, 2
    %vm1539 = vcmp.lt.s32.totalorder %v1518, 3
    %vm1540 = vcmp.lt.s32.totalorder %v1518, 4
    %v1541 = vsel %vm1537, %v1521, %v1524
    %v1542 = vsel %vm1540, %v1530, 2102212464
    %v1543 = vsel %vm1539, %v1527, %v1542
    %v1544 = vsel %vm1538, %v1541, %v1543
    %v1545 = vsel %vm1537, %v1524, %v1527
    %v1546 = vsel %vm1540, %v1533, 920167782
    %v1547 = vsel %vm1539, %v1530, %v1546
    %v1548 = vsel %vm1538, %v1545, %v1547
    %v1549 = vsel %vm1537, %v1527, %v1530
    %v1550 = vsel %vm1540, %v1536, 1326507024
    %v1551 = vsel %vm1539, %v1533, %v1550
    %v1552 = vsel %vm1538, %v1549, %v1551
    %v1553 = vshll.u32 %v1513, 8
    %v1554 = vmul.u32.u64.compose %v1553, %v1552
    %v1555 = vextract.low.u32 %v1554
    %v1556 = vextract.high.u32 %v1554
    %v1557 = vmul.u32.u64.compose %v1553, %v1548
    %v1558 = vextract.low.u32 %v1557
    %v1559 = vextract.high.u32 %v1557
    %v1560 = vmul.u32 %v1553, %v1544
    %v1561 = vadd.s32 %v1556, %v1558
    %vm1562 = vc.u32 %v1556, %v1558
    %v1563 = vadd.s32 %v1559, 1
    %v1564 = vsel %vm1562, %v1563, %v1559
    %v1565 = vadd.s32 %v1560, %v1564
    %v1566 = vadd.s32 %v1565, 536870912
    %v1567 = vshrl.u32 %v1566, 30
    %v1568 = vshll.u32 %v1567, 30
    %v1569 = vsub.s32 %v1565, %v1568
    %vm1570 = vcmp.lt.s32.totalorder %v1569, 0
    %v1571 = vsub.s32 0, %v1569
    %v1572 = vsel %vm1570, %v1571, %v1569
    %v1573 = vclz %v1572
    %v1574 = vsub.s32 %v1573, 2
    %vm1575 = vcmp.gt.s32.totalorder 0, %v1574
    %v1576 = vsel %vm1575, 0, %v1574
    %v1577 = vsub.s32 32, %v1576
    %v1578 = vshll.u32 %v1569, %v1576
    %v1579 = vshrl.u32 %v1561, %v1577
    %v1580 = vor.u32 %v1578, %v1579
    %v1581 = vsub.s32 4294967266, %v1576
    %v1582 = vadd.s32 %v1581, 127
    %v1583 = vshll.u32 %v1582, 23
    %v1584 = vor.u32 4788187, %v1583
    %v1585 = vand.u32 2147483647, %v1584
    %v1587 = vcvt.s32.f32 %v1580
    %v1588 = vmul.f32 %v1587, %v1585
    %v1589 = vxor.u32 %v1588, 2147483648
    %v1590 = vsel %vm1507, %v1589, %v1588
    %v1591 = vsub.s32 4, %v1567
    %v1592 = vsel %vm1507, %v1591, %v1567
    %v1593 = vsel %vm1506, %v1400, %v1590
    %v1594 = vsel %vm1506, 0, %v1592
    %v1595 = vcosq.f32.pop %v1593
    %v1596 = vsinq.f32.pop %v1593
    %vm1597 = vweird.f32 %v1400
    %v1598 = vadd.s32 %v1594, 3
    %v1599 = vand.u32 %v1598, 3
    %vm1600 = vcmp.lt.s32.totalorder %v1599, 2
    %vm1601 = vcmp.eq.s32.totalorder %v1599, 0
    %v1602 = vxor.u32 %v1596, 2147483648
    %v1603 = vsel %vm1601, %v1595, %v1602
    %vm1604 = vcmp.eq.s32.totalorder %v1599, 2
    %v1605 = vxor.u32 %v1595, 2147483648
    %v1606 = vsel %vm1604, %v1605, %v1596
    %v1607 = vsel %vm1600, %v1603, %v1606
    %v1608 = vsel %vm1597, nan, %v1607
    %v1611 = vcombine.high %v1504, %v1504
    %v1612 = vcombine.high %v1608, %v1608
    %v1613 = vrot.slane %v1504, 3
    %v1614 = vrot.slane %v1611, 3
    %v1615 = vrot.slane %v1608, 3
    %v1616 = vrot.slane %v1612, 3
    %1621 = vst [vmem:[#allocation5 + $0x40] sm:$0xe0] %v1613
    %1622 = vst [vmem:[#allocation5 + $0x48] sm:$0xe0] %v1614
    %1623 = vst [vmem:[#allocation5 + $0x50] sm:$0xe0] %v1615
    %1624 = vst [vmem:[#allocation5 + $0x58] sm:$0xe0] %v1616
    %v1625 = vadd.f32 %v1397, 1.5707964
    %v1626 = vadd.f32 %v1398, 1.5707964
    %v1627 = vand.u32 2147483647, %v1625
    %vm1628 = vcmp.le.f32.partialorder %v1627, 0.7853982
    %vm1629 = vcmp.lt.s32.totalorder %v1625, 0
    %v1630 = vand.u32 %v1625, 2139095040
    %v1631 = vshrl.u32 %v1630, 23
    %v1632 = vsub.s32 %v1631, 127
    %v1633 = vand.u32 2147483647, %v1625
    %v1634 = vand.u32 %v1633, 8388607
    %v1635 = vor.u32 %v1634, 8388608
    %v1636 = vsub.s32 0, %v1635
    %v1637 = vadd.s32 %v1632, 1
    %vm1638 = vcmp.gt.s32.totalorder %v1637, 0
    %v1639 = vsel %vm1638, %v1637, 0
    %v1640 = vshrl.u32 %v1639, 5
    %v1641 = vand.u32 %v1639, 31
    %v1642 = vsub.s32 32, %v1641
    %v1643 = vshrl.u32 683565275, %v1642
    %v1644 = vshll.u32 683565275, %v1641
    %v1645 = vshrl.u32 2475754826, %v1642
    %v1646 = vor.u32 %v1644, %v1645
    %v1647 = vshll.u32 2475754826, %v1641
    %v1648 = vshrl.u32 2131351028, %v1642
    %v1649 = vor.u32 %v1647, %v1648
    %v1650 = vshll.u32 2131351028, %v1641
    %v1651 = vshrl.u32 2102212464, %v1642
    %v1652 = vor.u32 %v1650, %v1651
    %v1653 = vshll.u32 2102212464, %v1641
    %v1654 = vshrl.u32 920167782, %v1642
    %v1655 = vor.u32 %v1653, %v1654
    %v1656 = vshll.u32 920167782, %v1641
    %v1657 = vshrl.u32 1326507024, %v1642
    %v1658 = vor.u32 %v1656, %v1657
    %vm1659 = vcmp.lt.s32.totalorder %v1640, 1
    %vm1660 = vcmp.lt.s32.totalorder %v1640, 2
    %vm1661 = vcmp.lt.s32.totalorder %v1640, 3
    %vm1662 = vcmp.lt.s32.totalorder %v1640, 4
    %v1663 = vsel %vm1659, %v1643, %v1646
    %v1664 = vsel %vm1662, %v1652, 2102212464
    %v1665 = vsel %vm1661, %v1649, %v1664
    %v1666 = vsel %vm1660, %v1663, %v1665
    %v1667 = vsel %vm1659, %v1646, %v1649
    %v1668 = vsel %vm1662, %v1655, 920167782
    %v1669 = vsel %vm1661, %v1652, %v1668
    %v1670 = vsel %vm1660, %v1667, %v1669
    %v1671 = vsel %vm1659, %v1649, %v1652
    %v1672 = vsel %vm1662, %v1658, 1326507024
    %v1673 = vsel %vm1661, %v1655, %v1672
    %v1674 = vsel %vm1660, %v1671, %v1673
    %v1675 = vshll.u32 %v1635, 8
    %v1676 = vmul.u32.u64.compose %v1675, %v1674
    %v1677 = vextract.low.u32 %v1676
    %v1678 = vextract.high.u32 %v1676
    %v1679 = vmul.u32.u64.compose %v1675, %v1670
    %v1680 = vextract.low.u32 %v1679
    %v1681 = vextract.high.u32 %v1679
    %v1682 = vmul.u32 %v1675, %v1666
    %v1683 = vadd.s32 %v1678, %v1680
    %vm1684 = vc.u32 %v1678, %v1680
    %v1685 = vadd.s32 %v1681, 1
    %v1686 = vsel %vm1684, %v1685, %v1681
    %v1687 = vadd.s32 %v1682, %v1686
    %v1688 = vadd.s32 %v1687, 536870912
    %v1689 = vshrl.u32 %v1688, 30
    %v1690 = vshll.u32 %v1689, 30
    %v1691 = vsub.s32 %v1687, %v1690
    %vm1692 = vcmp.lt.s32.totalorder %v1691, 0
    %v1693 = vsub.s32 0, %v1691
    %v1694 = vsel %vm1692, %v1693, %v1691
    %v1695 = vclz %v1694
    %v1696 = vsub.s32 %v1695, 2
    %vm1697 = vcmp.gt.s32.totalorder 0, %v1696
    %v1698 = vsel %vm1697, 0, %v1696
    %v1699 = vsub.s32 32, %v1698
    %v1700 = vshll.u32 %v1691, %v1698
    %v1701 = vshrl.u32 %v1683, %v1699
    %v1702 = vor.u32 %v1700, %v1701
    %v1703 = vsub.s32 4294967266, %v1698
    %v1704 = vadd.s32 %v1703, 127
    %v1705 = vshll.u32 %v1704, 23
    %v1706 = vor.u32 4788187, %v1705
    %v1707 = vand.u32 2147483647, %v1706
    %v1709 = vcvt.s32.f32 %v1702
    %v1710 = vmul.f32 %v1709, %v1707
    %v1711 = vxor.u32 %v1710, 2147483648
    %v1712 = vsel %vm1629, %v1711, %v1710
    %v1713 = vsub.s32 4, %v1689
    %v1714 = vsel %vm1629, %v1713, %v1689
    %v1715 = vsel %vm1628, %v1625, %v1712
    %v1716 = vsel %vm1628, 0, %v1714
    %v1717 = vcosq.f32.pop %v1715
    %v1718 = vsinq.f32.pop %v1715
    %vm1719 = vweird.f32 %v1625
    %v1720 = vadd.s32 %v1716, 3
    %v1721 = vand.u32 %v1720, 3
    %vm1722 = vcmp.lt.s32.totalorder %v1721, 2
    %vm1723 = vcmp.eq.s32.totalorder %v1721, 0
    %v1724 = vxor.u32 %v1718, 2147483648
    %v1725 = vsel %vm1723, %v1717, %v1724
    %vm1726 = vcmp.eq.s32.totalorder %v1721, 2
    %v1727 = vxor.u32 %v1717, 2147483648
    %v1728 = vsel %vm1726, %v1727, %v1718
    %v1729 = vsel %vm1722, %v1725, %v1728
    %v1730 = vsel %vm1719, nan, %v1729
    %v1731 = vand.u32 2147483647, %v1626
    %vm1732 = vcmp.le.f32.partialorder %v1731, 0.7853982
    %vm1733 = vcmp.lt.s32.totalorder %v1626, 0
    %v1734 = vand.u32 %v1626, 2139095040
    %v1735 = vshrl.u32 %v1734, 23
    %v1736 = vsub.s32 %v1735, 127
    %v1737 = vand.u32 2147483647, %v1626
    %v1738 = vand.u32 %v1737, 8388607
    %v1739 = vor.u32 %v1738, 8388608
    %v1740 = vsub.s32 0, %v1739
    %v1741 = vadd.s32 %v1736, 1
    %vm1742 = vcmp.gt.s32.totalorder %v1741, 0
    %v1743 = vsel %vm1742, %v1741, 0
    %v1744 = vshrl.u32 %v1743, 5
    %v1745 = vand.u32 %v1743, 31
    %v1746 = vsub.s32 32, %v1745
    %v1747 = vshrl.u32 683565275, %v1746
    %v1748 = vshll.u32 683565275, %v1745
    %v1749 = vshrl.u32 2475754826, %v1746
    %v1750 = vor.u32 %v1748, %v1749
    %v1751 = vshll.u32 2475754826, %v1745
    %v1752 = vshrl.u32 2131351028, %v1746
    %v1753 = vor.u32 %v1751, %v1752
    %v1754 = vshll.u32 2131351028, %v1745
    %v1755 = vshrl.u32 2102212464, %v1746
    %v1756 = vor.u32 %v1754, %v1755
    %v1757 = vshll.u32 2102212464, %v1745
    %v1758 = vshrl.u32 920167782, %v1746
    %v1759 = vor.u32 %v1757, %v1758
    %v1760 = vshll.u32 920167782, %v1745
    %v1761 = vshrl.u32 1326507024, %v1746
    %v1762 = vor.u32 %v1760, %v1761
    %vm1763 = vcmp.lt.s32.totalorder %v1744, 1
    %vm1764 = vcmp.lt.s32.totalorder %v1744, 2
    %vm1765 = vcmp.lt.s32.totalorder %v1744, 3
    %vm1766 = vcmp.lt.s32.totalorder %v1744, 4
    %v1767 = vsel %vm1763, %v1747, %v1750
    %v1768 = vsel %vm1766, %v1756, 2102212464
    %v1769 = vsel %vm1765, %v1753, %v1768
    %v1770 = vsel %vm1764, %v1767, %v1769
    %v1771 = vsel %vm1763, %v1750, %v1753
    %v1772 = vsel %vm1766, %v1759, 920167782
    %v1773 = vsel %vm1765, %v1756, %v1772
    %v1774 = vsel %vm1764, %v1771, %v1773
    %v1775 = vsel %vm1763, %v1753, %v1756
    %v1776 = vsel %vm1766, %v1762, 1326507024
    %v1777 = vsel %vm1765, %v1759, %v1776
    %v1778 = vsel %vm1764, %v1775, %v1777
    %v1779 = vshll.u32 %v1739, 8
    %v1780 = vmul.u32.u64.compose %v1779, %v1778
    %v1781 = vextract.low.u32 %v1780
    %v1782 = vextract.high.u32 %v1780
    %v1783 = vmul.u32.u64.compose %v1779, %v1774
    %v1784 = vextract.low.u32 %v1783
    %v1785 = vextract.high.u32 %v1783
    %v1786 = vmul.u32 %v1779, %v1770
    %v1787 = vadd.s32 %v1782, %v1784
    %vm1788 = vc.u32 %v1782, %v1784
    %v1789 = vadd.s32 %v1785, 1
    %v1790 = vsel %vm1788, %v1789, %v1785
    %v1791 = vadd.s32 %v1786, %v1790
    %v1792 = vadd.s32 %v1791, 536870912
    %v1793 = vshrl.u32 %v1792, 30
    %v1794 = vshll.u32 %v1793, 30
    %v1795 = vsub.s32 %v1791, %v1794
    %vm1796 = vcmp.lt.s32.totalorder %v1795, 0
    %v1797 = vsub.s32 0, %v1795
    %v1798 = vsel %vm1796, %v1797, %v1795
    %v1799 = vclz %v1798
    %v1800 = vsub.s32 %v1799, 2
    %vm1801 = vcmp.gt.s32.totalorder 0, %v1800
    %v1802 = vsel %vm1801, 0, %v1800
    %v1803 = vsub.s32 32, %v1802
    %v1804 = vshll.u32 %v1795, %v1802
    %v1805 = vshrl.u32 %v1787, %v1803
    %v1806 = vor.u32 %v1804, %v1805
    %v1807 = vsub.s32 4294967266, %v1802
    %v1808 = vadd.s32 %v1807, 127
    %v1809 = vshll.u32 %v1808, 23
    %v1810 = vor.u32 4788187, %v1809
    %v1811 = vand.u32 2147483647, %v1810
    %v1813 = vcvt.s32.f32 %v1806
    %v1814 = vmul.f32 %v1813, %v1811
    %v1815 = vxor.u32 %v1814, 2147483648
    %v1816 = vsel %vm1733, %v1815, %v1814
    %v1817 = vsub.s32 4, %v1793
    %v1818 = vsel %vm1733, %v1817, %v1793
    %v1819 = vsel %vm1732, %v1626, %v1816
    %v1820 = vsel %vm1732, 0, %v1818
    %v1821 = vcosq.f32.pop %v1819
    %v1822 = vsinq.f32.pop %v1819
    %vm1823 = vweird.f32 %v1626
    %v1824 = vadd.s32 %v1820, 3
    %v1825 = vand.u32 %v1824, 3
    %vm1826 = vcmp.lt.s32.totalorder %v1825, 2
    %vm1827 = vcmp.eq.s32.totalorder %v1825, 0
    %v1828 = vxor.u32 %v1822, 2147483648
    %v1829 = vsel %vm1827, %v1821, %v1828
    %vm1830 = vcmp.eq.s32.totalorder %v1825, 2
    %v1831 = vxor.u32 %v1821, 2147483648
    %v1832 = vsel %vm1830, %v1831, %v1822
    %v1833 = vsel %vm1826, %v1829, %v1832
    %v1834 = vsel %vm1823, nan, %v1833
    %v1837 = vcombine.high %v1730, %v1730
    %v1838 = vcombine.high %v1834, %v1834
    %1841 = vst [vmem:[#allocation5 + $0x60] sm:$0x7] %v1730
    %1842 = vst [vmem:[#allocation5 + $0x68] sm:$0x7] %v1837
    %1843 = vst [vmem:[#allocation5 + $0x70] sm:$0x7] %v1834
    %1844 = vst [vmem:[#allocation5 + $0x78] sm:$0x7] %v1838
    %v1845 = vmul.f32 %v21, 50.265484
    %v1846 = vmul.f32 %v22, 50.265484
    %v1847 = vadd.f32 %v1845, 0.0
    %v1848 = vadd.f32 %v1846, 0.0
    %v1849 = vand.u32 2147483647, %v1847
    %vm1850 = vcmp.le.f32.partialorder %v1849, 0.7853982
    %vm1851 = vcmp.lt.s32.totalorder %v1847, 0
    %v1852 = vand.u32 %v1847, 2139095040
    %v1853 = vshrl.u32 %v1852, 23
    %v1854 = vsub.s32 %v1853, 127
    %v1855 = vand.u32 2147483647, %v1847
    %v1856 = vand.u32 %v1855, 8388607
    %v1857 = vor.u32 %v1856, 8388608
    %v1858 = vsub.s32 0, %v1857
    %v1859 = vadd.s32 %v1854, 1
    %vm1860 = vcmp.gt.s32.totalorder %v1859, 0
    %v1861 = vsel %vm1860, %v1859, 0
    %v1862 = vshrl.u32 %v1861, 5
    %v1863 = vand.u32 %v1861, 31
    %v1864 = vsub.s32 32, %v1863
    %v1865 = vshrl.u32 683565275, %v1864
    %v1866 = vshll.u32 683565275, %v1863
    %v1867 = vshrl.u32 2475754826, %v1864
    %v1868 = vor.u32 %v1866, %v1867
    %v1869 = vshll.u32 2475754826, %v1863
    %v1870 = vshrl.u32 2131351028, %v1864
    %v1871 = vor.u32 %v1869, %v1870
    %v1872 = vshll.u32 2131351028, %v1863
    %v1873 = vshrl.u32 2102212464, %v1864
    %v1874 = vor.u32 %v1872, %v1873
    %v1875 = vshll.u32 2102212464, %v1863
    %v1876 = vshrl.u32 920167782, %v1864
    %v1877 = vor.u32 %v1875, %v1876
    %v1878 = vshll.u32 920167782, %v1863
    %v1879 = vshrl.u32 1326507024, %v1864
    %v1880 = vor.u32 %v1878, %v1879
    %vm1881 = vcmp.lt.s32.totalorder %v1862, 1
    %vm1882 = vcmp.lt.s32.totalorder %v1862, 2
    %vm1883 = vcmp.lt.s32.totalorder %v1862, 3
    %vm1884 = vcmp.lt.s32.totalorder %v1862, 4
    %v1885 = vsel %vm1881, %v1865, %v1868
    %v1886 = vsel %vm1884, %v1874, 2102212464
    %v1887 = vsel %vm1883, %v1871, %v1886
    %v1888 = vsel %vm1882, %v1885, %v1887
    %v1889 = vsel %vm1881, %v1868, %v1871
    %v1890 = vsel %vm1884, %v1877, 920167782
    %v1891 = vsel %vm1883, %v1874, %v1890
    %v1892 = vsel %vm1882, %v1889, %v1891
    %v1893 = vsel %vm1881, %v1871, %v1874
    %v1894 = vsel %vm1884, %v1880, 1326507024
    %v1895 = vsel %vm1883, %v1877, %v1894
    %v1896 = vsel %vm1882, %v1893, %v1895
    %v1897 = vshll.u32 %v1857, 8
    %v1898 = vmul.u32.u64.compose %v1897, %v1896
    %v1899 = vextract.low.u32 %v1898
    %v1900 = vextract.high.u32 %v1898
    %v1901 = vmul.u32.u64.compose %v1897, %v1892
    %v1902 = vextract.low.u32 %v1901
    %v1903 = vextract.high.u32 %v1901
    %v1904 = vmul.u32 %v1897, %v1888
    %v1905 = vadd.s32 %v1900, %v1902
    %vm1906 = vc.u32 %v1900, %v1902
    %v1907 = vadd.s32 %v1903, 1
    %v1908 = vsel %vm1906, %v1907, %v1903
    %v1909 = vadd.s32 %v1904, %v1908
    %v1910 = vadd.s32 %v1909, 536870912
    %v1911 = vshrl.u32 %v1910, 30
    %v1912 = vshll.u32 %v1911, 30
    %v1913 = vsub.s32 %v1909, %v1912
    %vm1914 = vcmp.lt.s32.totalorder %v1913, 0
    %v1915 = vsub.s32 0, %v1913
    %v1916 = vsel %vm1914, %v1915, %v1913
    %v1917 = vclz %v1916
    %v1918 = vsub.s32 %v1917, 2
    %vm1919 = vcmp.gt.s32.totalorder 0, %v1918
    %v1920 = vsel %vm1919, 0, %v1918
    %v1921 = vsub.s32 32, %v1920
    %v1922 = vshll.u32 %v1913, %v1920
    %v1923 = vshrl.u32 %v1905, %v1921
    %v1924 = vor.u32 %v1922, %v1923
    %v1925 = vsub.s32 4294967266, %v1920
    %v1926 = vadd.s32 %v1925, 127
    %v1927 = vshll.u32 %v1926, 23
    %v1928 = vor.u32 4788187, %v1927
    %v1929 = vand.u32 2147483647, %v1928
    %v1931 = vcvt.s32.f32 %v1924
    %v1932 = vmul.f32 %v1931, %v1929
    %v1933 = vxor.u32 %v1932, 2147483648
    %v1934 = vsel %vm1851, %v1933, %v1932
    %v1935 = vsub.s32 4, %v1911
    %v1936 = vsel %vm1851, %v1935, %v1911
    %v1937 = vsel %vm1850, %v1847, %v1934
    %v1938 = vsel %vm1850, 0, %v1936
    %v1939 = vcosq.f32.pop %v1937
    %v1940 = vsinq.f32.pop %v1937
    %vm1941 = vweird.f32 %v1847
    %v1942 = vadd.s32 %v1938, 3
    %v1943 = vand.u32 %v1942, 3
    %vm1944 = vcmp.lt.s32.totalorder %v1943, 2
    %vm1945 = vcmp.eq.s32.totalorder %v1943, 0
    %v1946 = vxor.u32 %v1940, 2147483648
    %v1947 = vsel %vm1945, %v1939, %v1946
    %vm1948 = vcmp.eq.s32.totalorder %v1943, 2
    %v1949 = vxor.u32 %v1939, 2147483648
    %v1950 = vsel %vm1948, %v1949, %v1940
    %v1951 = vsel %vm1944, %v1947, %v1950
    %v1952 = vsel %vm1941, nan, %v1951
    %v1953 = vand.u32 2147483647, %v1848
    %vm1954 = vcmp.le.f32.partialorder %v1953, 0.7853982
    %vm1955 = vcmp.lt.s32.totalorder %v1848, 0
    %v1956 = vand.u32 %v1848, 2139095040
    %v1957 = vshrl.u32 %v1956, 23
    %v1958 = vsub.s32 %v1957, 127
    %v1959 = vand.u32 2147483647, %v1848
    %v1960 = vand.u32 %v1959, 8388607
    %v1961 = vor.u32 %v1960, 8388608
    %v1962 = vsub.s32 0, %v1961
    %v1963 = vadd.s32 %v1958, 1
    %vm1964 = vcmp.gt.s32.totalorder %v1963, 0
    %v1965 = vsel %vm1964, %v1963, 0
    %v1966 = vshrl.u32 %v1965, 5
    %v1967 = vand.u32 %v1965, 31
    %v1968 = vsub.s32 32, %v1967
    %v1969 = vshrl.u32 683565275, %v1968
    %v1970 = vshll.u32 683565275, %v1967
    %v1971 = vshrl.u32 2475754826, %v1968
    %v1972 = vor.u32 %v1970, %v1971
    %v1973 = vshll.u32 2475754826, %v1967
    %v1974 = vshrl.u32 2131351028, %v1968
    %v1975 = vor.u32 %v1973, %v1974
    %v1976 = vshll.u32 2131351028, %v1967
    %v1977 = vshrl.u32 2102212464, %v1968
    %v1978 = vor.u32 %v1976, %v1977
    %v1979 = vshll.u32 2102212464, %v1967
    %v1980 = vshrl.u32 920167782, %v1968
    %v1981 = vor.u32 %v1979, %v1980
    %v1982 = vshll.u32 920167782, %v1967
    %v1983 = vshrl.u32 1326507024, %v1968
    %v1984 = vor.u32 %v1982, %v1983
    %vm1985 = vcmp.lt.s32.totalorder %v1966, 1
    %vm1986 = vcmp.lt.s32.totalorder %v1966, 2
    %vm1987 = vcmp.lt.s32.totalorder %v1966, 3
    %vm1988 = vcmp.lt.s32.totalorder %v1966, 4
    %v1989 = vsel %vm1985, %v1969, %v1972
    %v1990 = vsel %vm1988, %v1978, 2102212464
    %v1991 = vsel %vm1987, %v1975, %v1990
    %v1992 = vsel %vm1986, %v1989, %v1991
    %v1993 = vsel %vm1985, %v1972, %v1975
    %v1994 = vsel %vm1988, %v1981, 920167782
    %v1995 = vsel %vm1987, %v1978, %v1994
    %v1996 = vsel %vm1986, %v1993, %v1995
    %v1997 = vsel %vm1985, %v1975, %v1978
    %v1998 = vsel %vm1988, %v1984, 1326507024
    %v1999 = vsel %vm1987, %v1981, %v1998
    %v2000 = vsel %vm1986, %v1997, %v1999
    %v2001 = vshll.u32 %v1961, 8
    %v2002 = vmul.u32.u64.compose %v2001, %v2000
    %v2003 = vextract.low.u32 %v2002
    %v2004 = vextract.high.u32 %v2002
    %v2005 = vmul.u32.u64.compose %v2001, %v1996
    %v2006 = vextract.low.u32 %v2005
    %v2007 = vextract.high.u32 %v2005
    %v2008 = vmul.u32 %v2001, %v1992
    %v2009 = vadd.s32 %v2004, %v2006
    %vm2010 = vc.u32 %v2004, %v2006
    %v2011 = vadd.s32 %v2007, 1
    %v2012 = vsel %vm2010, %v2011, %v2007
    %v2013 = vadd.s32 %v2008, %v2012
    %v2014 = vadd.s32 %v2013, 536870912
    %v2015 = vshrl.u32 %v2014, 30
    %v2016 = vshll.u32 %v2015, 30
    %v2017 = vsub.s32 %v2013, %v2016
    %vm2018 = vcmp.lt.s32.totalorder %v2017, 0
    %v2019 = vsub.s32 0, %v2017
    %v2020 = vsel %vm2018, %v2019, %v2017
    %v2021 = vclz %v2020
    %v2022 = vsub.s32 %v2021, 2
    %vm2023 = vcmp.gt.s32.totalorder 0, %v2022
    %v2024 = vsel %vm2023, 0, %v2022
    %v2025 = vsub.s32 32, %v2024
    %v2026 = vshll.u32 %v2017, %v2024
    %v2027 = vshrl.u32 %v2009, %v2025
    %v2028 = vor.u32 %v2026, %v2027
    %v2029 = vsub.s32 4294967266, %v2024
    %v2030 = vadd.s32 %v2029, 127
    %v2031 = vshll.u32 %v2030, 23
    %v2032 = vor.u32 4788187, %v2031
    %v2033 = vand.u32 2147483647, %v2032
    %v2035 = vcvt.s32.f32 %v2028
    %v2036 = vmul.f32 %v2035, %v2033
    %v2037 = vxor.u32 %v2036, 2147483648
    %v2038 = vsel %vm1955, %v2037, %v2036
    %v2039 = vsub.s32 4, %v2015
    %v2040 = vsel %vm1955, %v2039, %v2015
    %v2041 = vsel %vm1954, %v1848, %v2038
    %v2042 = vsel %vm1954, 0, %v2040
    %v2043 = vcosq.f32.pop %v2041
    %v2044 = vsinq.f32.pop %v2041
    %vm2045 = vweird.f32 %v1848
    %v2046 = vadd.s32 %v2042, 3
    %v2047 = vand.u32 %v2046, 3
    %vm2048 = vcmp.lt.s32.totalorder %v2047, 2
    %vm2049 = vcmp.eq.s32.totalorder %v2047, 0
    %v2050 = vxor.u32 %v2044, 2147483648
    %v2051 = vsel %vm2049, %v2043, %v2050
    %vm2052 = vcmp.eq.s32.totalorder %v2047, 2
    %v2053 = vxor.u32 %v2043, 2147483648
    %v2054 = vsel %vm2052, %v2053, %v2044
    %v2055 = vsel %vm2048, %v2051, %v2054
    %v2056 = vsel %vm2045, nan, %v2055
    %v2059 = vcombine.high %v1952, %v1952
    %v2060 = vcombine.high %v2056, %v2056
    %v2061 = vrot.slane %v1952, 5
    %v2062 = vrot.slane %v2059, 5
    %v2063 = vrot.slane %v2056, 5
    %v2064 = vrot.slane %v2060, 5
    %2069 = vst [vmem:[#allocation5 + $0x60] sm:$0x38] %v2061
    %2070 = vst [vmem:[#allocation5 + $0x68] sm:$0x38] %v2062
    %2071 = vst [vmem:[#allocation5 + $0x70] sm:$0x38] %v2063
    %2072 = vst [vmem:[#allocation5 + $0x78] sm:$0x38] %v2064
    %v2073 = vadd.f32 %v1845, 1.5707964
    %v2074 = vadd.f32 %v1846, 1.5707964
    %v2075 = vand.u32 2147483647, %v2073
    %vm2076 = vcmp.le.f32.partialorder %v2075, 0.7853982
    %vm2077 = vcmp.lt.s32.totalorder %v2073, 0
    %v2078 = vand.u32 %v2073, 2139095040
    %v2079 = vshrl.u32 %v2078, 23
    %v2080 = vsub.s32 %v2079, 127
    %v2081 = vand.u32 2147483647, %v2073
    %v2082 = vand.u32 %v2081, 8388607
    %v2083 = vor.u32 %v2082, 8388608
    %v2084 = vsub.s32 0, %v2083
    %v2085 = vadd.s32 %v2080, 1
    %vm2086 = vcmp.gt.s32.totalorder %v2085, 0
    %v2087 = vsel %vm2086, %v2085, 0
    %v2088 = vshrl.u32 %v2087, 5
    %v2089 = vand.u32 %v2087, 31
    %v2090 = vsub.s32 32, %v2089
    %v2091 = vshrl.u32 683565275, %v2090
    %v2092 = vshll.u32 683565275, %v2089
    %v2093 = vshrl.u32 2475754826, %v2090
    %v2094 = vor.u32 %v2092, %v2093
    %v2095 = vshll.u32 2475754826, %v2089
    %v2096 = vshrl.u32 2131351028, %v2090
    %v2097 = vor.u32 %v2095, %v2096
    %v2098 = vshll.u32 2131351028, %v2089
    %v2099 = vshrl.u32 2102212464, %v2090
    %v2100 = vor.u32 %v2098, %v2099
    %v2101 = vshll.u32 2102212464, %v2089
    %v2102 = vshrl.u32 920167782, %v2090
    %v2103 = vor.u32 %v2101, %v2102
    %v2104 = vshll.u32 920167782, %v2089
    %v2105 = vshrl.u32 1326507024, %v2090
    %v2106 = vor.u32 %v2104, %v2105
    %vm2107 = vcmp.lt.s32.totalorder %v2088, 1
    %vm2108 = vcmp.lt.s32.totalorder %v2088, 2
    %vm2109 = vcmp.lt.s32.totalorder %v2088, 3
    %vm2110 = vcmp.lt.s32.totalorder %v2088, 4
    %v2111 = vsel %vm2107, %v2091, %v2094
    %v2112 = vsel %vm2110, %v2100, 2102212464
    %v2113 = vsel %vm2109, %v2097, %v2112
    %v2114 = vsel %vm2108, %v2111, %v2113
    %v2115 = vsel %vm2107, %v2094, %v2097
    %v2116 = vsel %vm2110, %v2103, 920167782
    %v2117 = vsel %vm2109, %v2100, %v2116
    %v2118 = vsel %vm2108, %v2115, %v2117
    %v2119 = vsel %vm2107, %v2097, %v2100
    %v2120 = vsel %vm2110, %v2106, 1326507024
    %v2121 = vsel %vm2109, %v2103, %v2120
    %v2122 = vsel %vm2108, %v2119, %v2121
    %v2123 = vshll.u32 %v2083, 8
    %v2124 = vmul.u32.u64.compose %v2123, %v2122
    %v2125 = vextract.low.u32 %v2124
    %v2126 = vextract.high.u32 %v2124
    %v2127 = vmul.u32.u64.compose %v2123, %v2118
    %v2128 = vextract.low.u32 %v2127
    %v2129 = vextract.high.u32 %v2127
    %v2130 = vmul.u32 %v2123, %v2114
    %v2131 = vadd.s32 %v2126, %v2128
    %vm2132 = vc.u32 %v2126, %v2128
    %v2133 = vadd.s32 %v2129, 1
    %v2134 = vsel %vm2132, %v2133, %v2129
    %v2135 = vadd.s32 %v2130, %v2134
    %v2136 = vadd.s32 %v2135, 536870912
    %v2137 = vshrl.u32 %v2136, 30
    %v2138 = vshll.u32 %v2137, 30
    %v2139 = vsub.s32 %v2135, %v2138
    %vm2140 = vcmp.lt.s32.totalorder %v2139, 0
    %v2141 = vsub.s32 0, %v2139
    %v2142 = vsel %vm2140, %v2141, %v2139
    %v2143 = vclz %v2142
    %v2144 = vsub.s32 %v2143, 2
    %vm2145 = vcmp.gt.s32.totalorder 0, %v2144
    %v2146 = vsel %vm2145, 0, %v2144
    %v2147 = vsub.s32 32, %v2146
    %v2148 = vshll.u32 %v2139, %v2146
    %v2149 = vshrl.u32 %v2131, %v2147
    %v2150 = vor.u32 %v2148, %v2149
    %v2151 = vsub.s32 4294967266, %v2146
    %v2152 = vadd.s32 %v2151, 127
    %v2153 = vshll.u32 %v2152, 23
    %v2154 = vor.u32 4788187, %v2153
    %v2155 = vand.u32 2147483647, %v2154
    %v2157 = vcvt.s32.f32 %v2150
    %v2158 = vmul.f32 %v2157, %v2155
    %v2159 = vxor.u32 %v2158, 2147483648
    %v2160 = vsel %vm2077, %v2159, %v2158
    %v2161 = vsub.s32 4, %v2137
    %v2162 = vsel %vm2077, %v2161, %v2137
    %v2163 = vsel %vm2076, %v2073, %v2160
    %v2164 = vsel %vm2076, 0, %v2162
    %v2165 = vcosq.f32.pop %v2163
    %v2166 = vsinq.f32.pop %v2163
    %vm2167 = vweird.f32 %v2073
    %v2168 = vadd.s32 %v2164, 3
    %v2169 = vand.u32 %v2168, 3
    %vm2170 = vcmp.lt.s32.totalorder %v2169, 2
    %vm2171 = vcmp.eq.s32.totalorder %v2169, 0
    %v2172 = vxor.u32 %v2166, 2147483648
    %v2173 = vsel %vm2171, %v2165, %v2172
    %vm2174 = vcmp.eq.s32.totalorder %v2169, 2
    %v2175 = vxor.u32 %v2165, 2147483648
    %v2176 = vsel %vm2174, %v2175, %v2166
    %v2177 = vsel %vm2170, %v2173, %v2176
    %v2178 = vsel %vm2167, nan, %v2177
    %v2179 = vand.u32 2147483647, %v2074
    %vm2180 = vcmp.le.f32.partialorder %v2179, 0.7853982
    %vm2181 = vcmp.lt.s32.totalorder %v2074, 0
    %v2182 = vand.u32 %v2074, 2139095040
    %v2183 = vshrl.u32 %v2182, 23
    %v2184 = vsub.s32 %v2183, 127
    %v2185 = vand.u32 2147483647, %v2074
    %v2186 = vand.u32 %v2185, 8388607
    %v2187 = vor.u32 %v2186, 8388608
    %v2188 = vsub.s32 0, %v2187
    %v2189 = vadd.s32 %v2184, 1
    %vm2190 = vcmp.gt.s32.totalorder %v2189, 0
    %v2191 = vsel %vm2190, %v2189, 0
    %v2192 = vshrl.u32 %v2191, 5
    %v2193 = vand.u32 %v2191, 31
    %v2194 = vsub.s32 32, %v2193
    %v2195 = vshrl.u32 683565275, %v2194
    %v2196 = vshll.u32 683565275, %v2193
    %v2197 = vshrl.u32 2475754826, %v2194
    %v2198 = vor.u32 %v2196, %v2197
    %v2199 = vshll.u32 2475754826, %v2193
    %v2200 = vshrl.u32 2131351028, %v2194
    %v2201 = vor.u32 %v2199, %v2200
    %v2202 = vshll.u32 2131351028, %v2193
    %v2203 = vshrl.u32 2102212464, %v2194
    %v2204 = vor.u32 %v2202, %v2203
    %v2205 = vshll.u32 2102212464, %v2193
    %v2206 = vshrl.u32 920167782, %v2194
    %v2207 = vor.u32 %v2205, %v2206
    %v2208 = vshll.u32 920167782, %v2193
    %v2209 = vshrl.u32 1326507024, %v2194
    %v2210 = vor.u32 %v2208, %v2209
    %vm2211 = vcmp.lt.s32.totalorder %v2192, 1
    %vm2212 = vcmp.lt.s32.totalorder %v2192, 2
    %vm2213 = vcmp.lt.s32.totalorder %v2192, 3
    %vm2214 = vcmp.lt.s32.totalorder %v2192, 4
    %v2215 = vsel %vm2211, %v2195, %v2198
    %v2216 = vsel %vm2214, %v2204, 2102212464
    %v2217 = vsel %vm2213, %v2201, %v2216
    %v2218 = vsel %vm2212, %v2215, %v2217
    %v2219 = vsel %vm2211, %v2198, %v2201
    %v2220 = vsel %vm2214, %v2207, 920167782
    %v2221 = vsel %vm2213, %v2204, %v2220
    %v2222 = vsel %vm2212, %v2219, %v2221
    %v2223 = vsel %vm2211, %v2201, %v2204
    %v2224 = vsel %vm2214, %v2210, 1326507024
    %v2225 = vsel %vm2213, %v2207, %v2224
    %v2226 = vsel %vm2212, %v2223, %v2225
    %v2227 = vshll.u32 %v2187, 8
    %v2228 = vmul.u32.u64.compose %v2227, %v2226
    %v2229 = vextract.low.u32 %v2228
    %v2230 = vextract.high.u32 %v2228
    %v2231 = vmul.u32.u64.compose %v2227, %v2222
    %v2232 = vextract.low.u32 %v2231
    %v2233 = vextract.high.u32 %v2231
    %v2234 = vmul.u32 %v2227, %v2218
    %v2235 = vadd.s32 %v2230, %v2232
    %vm2236 = vc.u32 %v2230, %v2232
    %v2237 = vadd.s32 %v2233, 1
    %v2238 = vsel %vm2236, %v2237, %v2233
    %v2239 = vadd.s32 %v2234, %v2238
    %v2240 = vadd.s32 %v2239, 536870912
    %v2241 = vshrl.u32 %v2240, 30
    %v2242 = vshll.u32 %v2241, 30
    %v2243 = vsub.s32 %v2239, %v2242
    %vm2244 = vcmp.lt.s32.totalorder %v2243, 0
    %v2245 = vsub.s32 0, %v2243
    %v2246 = vsel %vm2244, %v2245, %v2243
    %v2247 = vclz %v2246
    %v2248 = vsub.s32 %v2247, 2
    %vm2249 = vcmp.gt.s32.totalorder 0, %v2248
    %v2250 = vsel %vm2249, 0, %v2248
    %v2251 = vsub.s32 32, %v2250
    %v2252 = vshll.u32 %v2243, %v2250
    %v2253 = vshrl.u32 %v2235, %v2251
    %v2254 = vor.u32 %v2252, %v2253
    %v2255 = vsub.s32 4294967266, %v2250
    %v2256 = vadd.s32 %v2255, 127
    %v2257 = vshll.u32 %v2256, 23
    %v2258 = vor.u32 4788187, %v2257
    %v2259 = vand.u32 2147483647, %v2258
    %v2261 = vcvt.s32.f32 %v2254
    %v2262 = vmul.f32 %v2261, %v2259
    %v2263 = vxor.u32 %v2262, 2147483648
    %v2264 = vsel %vm2181, %v2263, %v2262
    %v2265 = vsub.s32 4, %v2241
    %v2266 = vsel %vm2181, %v2265, %v2241
    %v2267 = vsel %vm2180, %v2074, %v2264
    %v2268 = vsel %vm2180, 0, %v2266
    %v2269 = vcosq.f32.pop %v2267
    %v2270 = vsinq.f32.pop %v2267
    %vm2271 = vweird.f32 %v2074
    %v2272 = vadd.s32 %v2268, 3
    %v2273 = vand.u32 %v2272, 3
    %vm2274 = vcmp.lt.s32.totalorder %v2273, 2
    %vm2275 = vcmp.eq.s32.totalorder %v2273, 0
    %v2276 = vxor.u32 %v2270, 2147483648
    %v2277 = vsel %vm2275, %v2269, %v2276
    %vm2278 = vcmp.eq.s32.totalorder %v2273, 2
    %v2279 = vxor.u32 %v2269, 2147483648
    %v2280 = vsel %vm2278, %v2279, %v2270
    %v2281 = vsel %vm2274, %v2277, %v2280
    %v2282 = vsel %vm2271, nan, %v2281
    %v2285 = vcombine.high %v2178, %v2178
    %v2286 = vcombine.high %v2282, %v2282
    %v2287 = vrot.slane %v2178, 2
    %v2288 = vrot.slane %v2285, 2
    %v2289 = vrot.slane %v2282, 2
    %v2290 = vrot.slane %v2286, 2
    %2295 = vst [vmem:[#allocation5 + $0x60] sm:$0xc0] %v2287
    %2296 = vst [vmem:[#allocation5 + $0x68] sm:$0xc0] %v2288
    %2297 = vst [vmem:[#allocation5 + $0x70] sm:$0xc0] %v2289
    %2298 = vst [vmem:[#allocation5 + $0x78] sm:$0xc0] %v2290
    %2299 = vst [vmem:[#allocation5 + $0x80] sm:$0x1] %v2287
    %2300 = vst [vmem:[#allocation5 + $0x88] sm:$0x1] %v2288
    %2301 = vst [vmem:[#allocation5 + $0x90] sm:$0x1] %v2289
    %2302 = vst [vmem:[#allocation5 + $0x98] sm:$0x1] %v2290
    %v2303 = vmul.f32 %v21, 100.53097
    %v2304 = vmul.f32 %v22, 100.53097
    %v2305 = vadd.f32 %v2303, 0.0
    %v2306 = vadd.f32 %v2304, 0.0
    %v2307 = vand.u32 2147483647, %v2305
    %vm2308 = vcmp.le.f32.partialorder %v2307, 0.7853982
    %vm2309 = vcmp.lt.s32.totalorder %v2305, 0
    %v2310 = vand.u32 %v2305, 2139095040
    %v2311 = vshrl.u32 %v2310, 23
    %v2312 = vsub.s32 %v2311, 127
    %v2313 = vand.u32 2147483647, %v2305
    %v2314 = vand.u32 %v2313, 8388607
    %v2315 = vor.u32 %v2314, 8388608
    %v2316 = vsub.s32 0, %v2315
    %v2317 = vadd.s32 %v2312, 1
    %vm2318 = vcmp.gt.s32.totalorder %v2317, 0
    %v2319 = vsel %vm2318, %v2317, 0
    %v2320 = vshrl.u32 %v2319, 5
    %v2321 = vand.u32 %v2319, 31
    %v2322 = vsub.s32 32, %v2321
    %v2323 = vshrl.u32 683565275, %v2322
    %v2324 = vshll.u32 683565275, %v2321
    %v2325 = vshrl.u32 2475754826, %v2322
    %v2326 = vor.u32 %v2324, %v2325
    %v2327 = vshll.u32 2475754826, %v2321
    %v2328 = vshrl.u32 2131351028, %v2322
    %v2329 = vor.u32 %v2327, %v2328
    %v2330 = vshll.u32 2131351028, %v2321
    %v2331 = vshrl.u32 2102212464, %v2322
    %v2332 = vor.u32 %v2330, %v2331
    %v2333 = vshll.u32 2102212464, %v2321
    %v2334 = vshrl.u32 920167782, %v2322
    %v2335 = vor.u32 %v2333, %v2334
    %v2336 = vshll.u32 920167782, %v2321
    %v2337 = vshrl.u32 1326507024, %v2322
    %v2338 = vor.u32 %v2336, %v2337
    %vm2339 = vcmp.lt.s32.totalorder %v2320, 1
    %vm2340 = vcmp.lt.s32.totalorder %v2320, 2
    %vm2341 = vcmp.lt.s32.totalorder %v2320, 3
    %vm2342 = vcmp.lt.s32.totalorder %v2320, 4
    %v2343 = vsel %vm2339, %v2323, %v2326
    %v2344 = vsel %vm2342, %v2332, 2102212464
    %v2345 = vsel %vm2341, %v2329, %v2344
    %v2346 = vsel %vm2340, %v2343, %v2345
    %v2347 = vsel %vm2339, %v2326, %v2329
    %v2348 = vsel %vm2342, %v2335, 920167782
    %v2349 = vsel %vm2341, %v2332, %v2348
    %v2350 = vsel %vm2340, %v2347, %v2349
    %v2351 = vsel %vm2339, %v2329, %v2332
    %v2352 = vsel %vm2342, %v2338, 1326507024
    %v2353 = vsel %vm2341, %v2335, %v2352
    %v2354 = vsel %vm2340, %v2351, %v2353
    %v2355 = vshll.u32 %v2315, 8
    %v2356 = vmul.u32.u64.compose %v2355, %v2354
    %v2357 = vextract.low.u32 %v2356
    %v2358 = vextract.high.u32 %v2356
    %v2359 = vmul.u32.u64.compose %v2355, %v2350
    %v2360 = vextract.low.u32 %v2359
    %v2361 = vextract.high.u32 %v2359
    %v2362 = vmul.u32 %v2355, %v2346
    %v2363 = vadd.s32 %v2358, %v2360
    %vm2364 = vc.u32 %v2358, %v2360
    %v2365 = vadd.s32 %v2361, 1
    %v2366 = vsel %vm2364, %v2365, %v2361
    %v2367 = vadd.s32 %v2362, %v2366
    %v2368 = vadd.s32 %v2367, 536870912
    %v2369 = vshrl.u32 %v2368, 30
    %v2370 = vshll.u32 %v2369, 30
    %v2371 = vsub.s32 %v2367, %v2370
    %vm2372 = vcmp.lt.s32.totalorder %v2371, 0
    %v2373 = vsub.s32 0, %v2371
    %v2374 = vsel %vm2372, %v2373, %v2371
    %v2375 = vclz %v2374
    %v2376 = vsub.s32 %v2375, 2
    %vm2377 = vcmp.gt.s32.totalorder 0, %v2376
    %v2378 = vsel %vm2377, 0, %v2376
    %v2379 = vsub.s32 32, %v2378
    %v2380 = vshll.u32 %v2371, %v2378
    %v2381 = vshrl.u32 %v2363, %v2379
    %v2382 = vor.u32 %v2380, %v2381
    %v2383 = vsub.s32 4294967266, %v2378
    %v2384 = vadd.s32 %v2383, 127
    %v2385 = vshll.u32 %v2384, 23
    %v2386 = vor.u32 4788187, %v2385
    %v2387 = vand.u32 2147483647, %v2386
    %v2389 = vcvt.s32.f32 %v2382
    %v2390 = vmul.f32 %v2389, %v2387
    %v2391 = vxor.u32 %v2390, 2147483648
    %v2392 = vsel %vm2309, %v2391, %v2390
    %v2393 = vsub.s32 4, %v2369
    %v2394 = vsel %vm2309, %v2393, %v2369
    %v2395 = vsel %vm2308, %v2305, %v2392
    %v2396 = vsel %vm2308, 0, %v2394
    %v2397 = vcosq.f32.pop %v2395
    %v2398 = vsinq.f32.pop %v2395
    %vm2399 = vweird.f32 %v2305
    %v2400 = vadd.s32 %v2396, 3
    %v2401 = vand.u32 %v2400, 3
    %vm2402 = vcmp.lt.s32.totalorder %v2401, 2
    %vm2403 = vcmp.eq.s32.totalorder %v2401, 0
    %v2404 = vxor.u32 %v2398, 2147483648
    %v2405 = vsel %vm2403, %v2397, %v2404
    %vm2406 = vcmp.eq.s32.totalorder %v2401, 2
    %v2407 = vxor.u32 %v2397, 2147483648
    %v2408 = vsel %vm2406, %v2407, %v2398
    %v2409 = vsel %vm2402, %v2405, %v2408
    %v2410 = vsel %vm2399, nan, %v2409
    %v2411 = vand.u32 2147483647, %v2306
    %vm2412 = vcmp.le.f32.partialorder %v2411, 0.7853982
    %vm2413 = vcmp.lt.s32.totalorder %v2306, 0
    %v2414 = vand.u32 %v2306, 2139095040
    %v2415 = vshrl.u32 %v2414, 23
    %v2416 = vsub.s32 %v2415, 127
    %v2417 = vand.u32 2147483647, %v2306
    %v2418 = vand.u32 %v2417, 8388607
    %v2419 = vor.u32 %v2418, 8388608
    %v2420 = vsub.s32 0, %v2419
    %v2421 = vadd.s32 %v2416, 1
    %vm2422 = vcmp.gt.s32.totalorder %v2421, 0
    %v2423 = vsel %vm2422, %v2421, 0
    %v2424 = vshrl.u32 %v2423, 5
    %v2425 = vand.u32 %v2423, 31
    %v2426 = vsub.s32 32, %v2425
    %v2427 = vshrl.u32 683565275, %v2426
    %v2428 = vshll.u32 683565275, %v2425
    %v2429 = vshrl.u32 2475754826, %v2426
    %v2430 = vor.u32 %v2428, %v2429
    %v2431 = vshll.u32 2475754826, %v2425
    %v2432 = vshrl.u32 2131351028, %v2426
    %v2433 = vor.u32 %v2431, %v2432
    %v2434 = vshll.u32 2131351028, %v2425
    %v2435 = vshrl.u32 2102212464, %v2426
    %v2436 = vor.u32 %v2434, %v2435
    %v2437 = vshll.u32 2102212464, %v2425
    %v2438 = vshrl.u32 920167782, %v2426
    %v2439 = vor.u32 %v2437, %v2438
    %v2440 = vshll.u32 920167782, %v2425
    %v2441 = vshrl.u32 1326507024, %v2426
    %v2442 = vor.u32 %v2440, %v2441
    %vm2443 = vcmp.lt.s32.totalorder %v2424, 1
    %vm2444 = vcmp.lt.s32.totalorder %v2424, 2
    %vm2445 = vcmp.lt.s32.totalorder %v2424, 3
    %vm2446 = vcmp.lt.s32.totalorder %v2424, 4
    %v2447 = vsel %vm2443, %v2427, %v2430
    %v2448 = vsel %vm2446, %v2436, 2102212464
    %v2449 = vsel %vm2445, %v2433, %v2448
    %v2450 = vsel %vm2444, %v2447, %v2449
    %v2451 = vsel %vm2443, %v2430, %v2433
    %v2452 = vsel %vm2446, %v2439, 920167782
    %v2453 = vsel %vm2445, %v2436, %v2452
    %v2454 = vsel %vm2444, %v2451, %v2453
    %v2455 = vsel %vm2443, %v2433, %v2436
    %v2456 = vsel %vm2446, %v2442, 1326507024
    %v2457 = vsel %vm2445, %v2439, %v2456
    %v2458 = vsel %vm2444, %v2455, %v2457
    %v2459 = vshll.u32 %v2419, 8
    %v2460 = vmul.u32.u64.compose %v2459, %v2458
    %v2461 = vextract.low.u32 %v2460
    %v2462 = vextract.high.u32 %v2460
    %v2463 = vmul.u32.u64.compose %v2459, %v2454
    %v2464 = vextract.low.u32 %v2463
    %v2465 = vextract.high.u32 %v2463
    %v2466 = vmul.u32 %v2459, %v2450
    %v2467 = vadd.s32 %v2462, %v2464
    %vm2468 = vc.u32 %v2462, %v2464
    %v2469 = vadd.s32 %v2465, 1
    %v2470 = vsel %vm2468, %v2469, %v2465
    %v2471 = vadd.s32 %v2466, %v2470
    %v2472 = vadd.s32 %v2471, 536870912
    %v2473 = vshrl.u32 %v2472, 30
    %v2474 = vshll.u32 %v2473, 30
    %v2475 = vsub.s32 %v2471, %v2474
    %vm2476 = vcmp.lt.s32.totalorder %v2475, 0
    %v2477 = vsub.s32 0, %v2475
    %v2478 = vsel %vm2476, %v2477, %v2475
    %v2479 = vclz %v2478
    %v2480 = vsub.s32 %v2479, 2
    %vm2481 = vcmp.gt.s32.totalorder 0, %v2480
    %v2482 = vsel %vm2481, 0, %v2480
    %v2483 = vsub.s32 32, %v2482
    %v2484 = vshll.u32 %v2475, %v2482
    %v2485 = vshrl.u32 %v2467, %v2483
    %v2486 = vor.u32 %v2484, %v2485
    %v2487 = vsub.s32 4294967266, %v2482
    %v2488 = vadd.s32 %v2487, 127
    %v2489 = vshll.u32 %v2488, 23
    %v2490 = vor.u32 4788187, %v2489
    %v2491 = vand.u32 2147483647, %v2490
    %v2493 = vcvt.s32.f32 %v2486
    %v2494 = vmul.f32 %v2493, %v2491
    %v2495 = vxor.u32 %v2494, 2147483648
    %v2496 = vsel %vm2413, %v2495, %v2494
    %v2497 = vsub.s32 4, %v2473
    %v2498 = vsel %vm2413, %v2497, %v2473
    %v2499 = vsel %vm2412, %v2306, %v2496
    %v2500 = vsel %vm2412, 0, %v2498
    %v2501 = vcosq.f32.pop %v2499
    %v2502 = vsinq.f32.pop %v2499
    %vm2503 = vweird.f32 %v2306
    %v2504 = vadd.s32 %v2500, 3
    %v2505 = vand.u32 %v2504, 3
    %vm2506 = vcmp.lt.s32.totalorder %v2505, 2
    %vm2507 = vcmp.eq.s32.totalorder %v2505, 0
    %v2508 = vxor.u32 %v2502, 2147483648
    %v2509 = vsel %vm2507, %v2501, %v2508
    %vm2510 = vcmp.eq.s32.totalorder %v2505, 2
    %v2511 = vxor.u32 %v2501, 2147483648
    %v2512 = vsel %vm2510, %v2511, %v2502
    %v2513 = vsel %vm2506, %v2509, %v2512
    %v2514 = vsel %vm2503, nan, %v2513
    %v2517 = vcombine.high %v2410, %v2410
    %v2518 = vcombine.high %v2514, %v2514
    %v2519 = vrot.slane %v2410, 7
    %v2520 = vrot.slane %v2517, 7
    %v2521 = vrot.slane %v2514, 7
    %v2522 = vrot.slane %v2518, 7
    %2527 = vst [vmem:[#allocation5 + $0x80] sm:$0xe] %v2519
    %2528 = vst [vmem:[#allocation5 + $0x88] sm:$0xe] %v2520
    %2529 = vst [vmem:[#allocation5 + $0x90] sm:$0xe] %v2521
    %2530 = vst [vmem:[#allocation5 + $0x98] sm:$0xe] %v2522
    %v2531 = vadd.f32 %v2303, 1.5707964
    %v2532 = vadd.f32 %v2304, 1.5707964
    %v2533 = vand.u32 2147483647, %v2531
    %vm2534 = vcmp.le.f32.partialorder %v2533, 0.7853982
    %vm2535 = vcmp.lt.s32.totalorder %v2531, 0
    %v2536 = vand.u32 %v2531, 2139095040
    %v2537 = vshrl.u32 %v2536, 23
    %v2538 = vsub.s32 %v2537, 127
    %v2539 = vand.u32 2147483647, %v2531
    %v2540 = vand.u32 %v2539, 8388607
    %v2541 = vor.u32 %v2540, 8388608
    %v2542 = vsub.s32 0, %v2541
    %v2543 = vadd.s32 %v2538, 1
    %vm2544 = vcmp.gt.s32.totalorder %v2543, 0
    %v2545 = vsel %vm2544, %v2543, 0
    %v2546 = vshrl.u32 %v2545, 5
    %v2547 = vand.u32 %v2545, 31
    %v2548 = vsub.s32 32, %v2547
    %v2549 = vshrl.u32 683565275, %v2548
    %v2550 = vshll.u32 683565275, %v2547
    %v2551 = vshrl.u32 2475754826, %v2548
    %v2552 = vor.u32 %v2550, %v2551
    %v2553 = vshll.u32 2475754826, %v2547
    %v2554 = vshrl.u32 2131351028, %v2548
    %v2555 = vor.u32 %v2553, %v2554
    %v2556 = vshll.u32 2131351028, %v2547
    %v2557 = vshrl.u32 2102212464, %v2548
    %v2558 = vor.u32 %v2556, %v2557
    %v2559 = vshll.u32 2102212464, %v2547
    %v2560 = vshrl.u32 920167782, %v2548
    %v2561 = vor.u32 %v2559, %v2560
    %v2562 = vshll.u32 920167782, %v2547
    %v2563 = vshrl.u32 1326507024, %v2548
    %v2564 = vor.u32 %v2562, %v2563
    %vm2565 = vcmp.lt.s32.totalorder %v2546, 1
    %vm2566 = vcmp.lt.s32.totalorder %v2546, 2
    %vm2567 = vcmp.lt.s32.totalorder %v2546, 3
    %vm2568 = vcmp.lt.s32.totalorder %v2546, 4
    %v2569 = vsel %vm2565, %v2549, %v2552
    %v2570 = vsel %vm2568, %v2558, 2102212464
    %v2571 = vsel %vm2567, %v2555, %v2570
    %v2572 = vsel %vm2566, %v2569, %v2571
    %v2573 = vsel %vm2565, %v2552, %v2555
    %v2574 = vsel %vm2568, %v2561, 920167782
    %v2575 = vsel %vm2567, %v2558, %v2574
    %v2576 = vsel %vm2566, %v2573, %v2575
    %v2577 = vsel %vm2565, %v2555, %v2558
    %v2578 = vsel %vm2568, %v2564, 1326507024
    %v2579 = vsel %vm2567, %v2561, %v2578
    %v2580 = vsel %vm2566, %v2577, %v2579
    %v2581 = vshll.u32 %v2541, 8
    %v2582 = vmul.u32.u64.compose %v2581, %v2580
    %v2583 = vextract.low.u32 %v2582
    %v2584 = vextract.high.u32 %v2582
    %v2585 = vmul.u32.u64.compose %v2581, %v2576
    %v2586 = vextract.low.u32 %v2585
    %v2587 = vextract.high.u32 %v2585
    %v2588 = vmul.u32 %v2581, %v2572
    %v2589 = vadd.s32 %v2584, %v2586
    %vm2590 = vc.u32 %v2584, %v2586
    %v2591 = vadd.s32 %v2587, 1
    %v2592 = vsel %vm2590, %v2591, %v2587
    %v2593 = vadd.s32 %v2588, %v2592
    %v2594 = vadd.s32 %v2593, 536870912
    %v2595 = vshrl.u32 %v2594, 30
    %v2596 = vshll.u32 %v2595, 30
    %v2597 = vsub.s32 %v2593, %v2596
    %vm2598 = vcmp.lt.s32.totalorder %v2597, 0
    %v2599 = vsub.s32 0, %v2597
    %v2600 = vsel %vm2598, %v2599, %v2597
    %v2601 = vclz %v2600
    %v2602 = vsub.s32 %v2601, 2
    %vm2603 = vcmp.gt.s32.totalorder 0, %v2602
    %v2604 = vsel %vm2603, 0, %v2602
    %v2605 = vsub.s32 32, %v2604
    %v2606 = vshll.u32 %v2597, %v2604
    %v2607 = vshrl.u32 %v2589, %v2605
    %v2608 = vor.u32 %v2606, %v2607
    %v2609 = vsub.s32 4294967266, %v2604
    %v2610 = vadd.s32 %v2609, 127
    %v2611 = vshll.u32 %v2610, 23
    %v2612 = vor.u32 4788187, %v2611
    %v2613 = vand.u32 2147483647, %v2612
    %v2615 = vcvt.s32.f32 %v2608
    %v2616 = vmul.f32 %v2615, %v2613
    %v2617 = vxor.u32 %v2616, 2147483648
    %v2618 = vsel %vm2535, %v2617, %v2616
    %v2619 = vsub.s32 4, %v2595
    %v2620 = vsel %vm2535, %v2619, %v2595
    %v2621 = vsel %vm2534, %v2531, %v2618
    %v2622 = vsel %vm2534, 0, %v2620
    %v2623 = vcosq.f32.pop %v2621
    %v2624 = vsinq.f32.pop %v2621
    %vm2625 = vweird.f32 %v2531
    %v2626 = vadd.s32 %v2622, 3
    %v2627 = vand.u32 %v2626, 3
    %vm2628 = vcmp.lt.s32.totalorder %v2627, 2
    %vm2629 = vcmp.eq.s32.totalorder %v2627, 0
    %v2630 = vxor.u32 %v2624, 2147483648
    %v2631 = vsel %vm2629, %v2623, %v2630
    %vm2632 = vcmp.eq.s32.totalorder %v2627, 2
    %v2633 = vxor.u32 %v2623, 2147483648
    %v2634 = vsel %vm2632, %v2633, %v2624
    %v2635 = vsel %vm2628, %v2631, %v2634
    %v2636 = vsel %vm2625, nan, %v2635
    %v2637 = vand.u32 2147483647, %v2532
    %vm2638 = vcmp.le.f32.partialorder %v2637, 0.7853982
    %vm2639 = vcmp.lt.s32.totalorder %v2532, 0
    %v2640 = vand.u32 %v2532, 2139095040
    %v2641 = vshrl.u32 %v2640, 23
    %v2642 = vsub.s32 %v2641, 127
    %v2643 = vand.u32 2147483647, %v2532
    %v2644 = vand.u32 %v2643, 8388607
    %v2645 = vor.u32 %v2644, 8388608
    %v2646 = vsub.s32 0, %v2645
    %v2647 = vadd.s32 %v2642, 1
    %vm2648 = vcmp.gt.s32.totalorder %v2647, 0
    %v2649 = vsel %vm2648, %v2647, 0
    %v2650 = vshrl.u32 %v2649, 5
    %v2651 = vand.u32 %v2649, 31
    %v2652 = vsub.s32 32, %v2651
    %v2653 = vshrl.u32 683565275, %v2652
    %v2654 = vshll.u32 683565275, %v2651
    %v2655 = vshrl.u32 2475754826, %v2652
    %v2656 = vor.u32 %v2654, %v2655
    %v2657 = vshll.u32 2475754826, %v2651
    %v2658 = vshrl.u32 2131351028, %v2652
    %v2659 = vor.u32 %v2657, %v2658
    %v2660 = vshll.u32 2131351028, %v2651
    %v2661 = vshrl.u32 2102212464, %v2652
    %v2662 = vor.u32 %v2660, %v2661
    %v2663 = vshll.u32 2102212464, %v2651
    %v2664 = vshrl.u32 920167782, %v2652
    %v2665 = vor.u32 %v2663, %v2664
    %v2666 = vshll.u32 920167782, %v2651
    %v2667 = vshrl.u32 1326507024, %v2652
    %v2668 = vor.u32 %v2666, %v2667
    %vm2669 = vcmp.lt.s32.totalorder %v2650, 1
    %vm2670 = vcmp.lt.s32.totalorder %v2650, 2
    %vm2671 = vcmp.lt.s32.totalorder %v2650, 3
    %vm2672 = vcmp.lt.s32.totalorder %v2650, 4
    %v2673 = vsel %vm2669, %v2653, %v2656
    %v2674 = vsel %vm2672, %v2662, 2102212464
    %v2675 = vsel %vm2671, %v2659, %v2674
    %v2676 = vsel %vm2670, %v2673, %v2675
    %v2677 = vsel %vm2669, %v2656, %v2659
    %v2678 = vsel %vm2672, %v2665, 920167782
    %v2679 = vsel %vm2671, %v2662, %v2678
    %v2680 = vsel %vm2670, %v2677, %v2679
    %v2681 = vsel %vm2669, %v2659, %v2662
    %v2682 = vsel %vm2672, %v2668, 1326507024
    %v2683 = vsel %vm2671, %v2665, %v2682
    %v2684 = vsel %vm2670, %v2681, %v2683
    %v2685 = vshll.u32 %v2645, 8
    %v2686 = vmul.u32.u64.compose %v2685, %v2684
    %v2687 = vextract.low.u32 %v2686
    %v2688 = vextract.high.u32 %v2686
    %v2689 = vmul.u32.u64.compose %v2685, %v2680
    %v2690 = vextract.low.u32 %v2689
    %v2691 = vextract.high.u32 %v2689
    %v2692 = vmul.u32 %v2685, %v2676
    %v2693 = vadd.s32 %v2688, %v2690
    %vm2694 = vc.u32 %v2688, %v2690
    %v2695 = vadd.s32 %v2691, 1
    %v2696 = vsel %vm2694, %v2695, %v2691
    %v2697 = vadd.s32 %v2692, %v2696
    %v2698 = vadd.s32 %v2697, 536870912
    %v2699 = vshrl.u32 %v2698, 30
    %v2700 = vshll.u32 %v2699, 30
    %v2701 = vsub.s32 %v2697, %v2700
    %vm2702 = vcmp.lt.s32.totalorder %v2701, 0
    %v2703 = vsub.s32 0, %v2701
    %v2704 = vsel %vm2702, %v2703, %v2701
    %v2705 = vclz %v2704
    %v2706 = vsub.s32 %v2705, 2
    %vm2707 = vcmp.gt.s32.totalorder 0, %v2706
    %v2708 = vsel %vm2707, 0, %v2706
    %v2709 = vsub.s32 32, %v2708
    %v2710 = vshll.u32 %v2701, %v2708
    %v2711 = vshrl.u32 %v2693, %v2709
    %v2712 = vor.u32 %v2710, %v2711
    %v2713 = vsub.s32 4294967266, %v2708
    %v2714 = vadd.s32 %v2713, 127
    %v2715 = vshll.u32 %v2714, 23
    %v2716 = vor.u32 4788187, %v2715
    %v2717 = vand.u32 2147483647, %v2716
    %v2719 = vcvt.s32.f32 %v2712
    %v2720 = vmul.f32 %v2719, %v2717
    %v2721 = vxor.u32 %v2720, 2147483648
    %v2722 = vsel %vm2639, %v2721, %v2720
    %v2723 = vsub.s32 4, %v2699
    %v2724 = vsel %vm2639, %v2723, %v2699
    %v2725 = vsel %vm2638, %v2532, %v2722
    %v2726 = vsel %vm2638, 0, %v2724
    %v2727 = vcosq.f32.pop %v2725
    %v2728 = vsinq.f32.pop %v2725
    %vm2729 = vweird.f32 %v2532
    %v2730 = vadd.s32 %v2726, 3
    %v2731 = vand.u32 %v2730, 3
    %vm2732 = vcmp.lt.s32.totalorder %v2731, 2
    %vm2733 = vcmp.eq.s32.totalorder %v2731, 0
    %v2734 = vxor.u32 %v2728, 2147483648
    %v2735 = vsel %vm2733, %v2727, %v2734
    %vm2736 = vcmp.eq.s32.totalorder %v2731, 2
    %v2737 = vxor.u32 %v2727, 2147483648
    %v2738 = vsel %vm2736, %v2737, %v2728
    %v2739 = vsel %vm2732, %v2735, %v2738
    %v2740 = vsel %vm2729, nan, %v2739
    %v2743 = vcombine.low %v2636, %v2636
    %v2744 = vcombine.low %v2740, %v2740
    %2747 = vst [vmem:[#allocation5 + $0x80] sm:$0x70] %v2743
    %2748 = vst [vmem:[#allocation5 + $0x88] sm:$0x70] %v2636
    %2749 = vst [vmem:[#allocation5 + $0x90] sm:$0x70] %v2744
    %2750 = vst [vmem:[#allocation5 + $0x98] sm:$0x70] %v2740
    // Predicated region
    $region10: #{tpu_custom_call.1} parent=1 // pred_check
      _
    $region11: #{tpu_custom_call.1} parent=1 // pred_check_branch
      %2752 = sbr.rel (0) target = $region13
    $region12: #{tpu_custom_call.1} parent=1 // pred_region
      %s2754 = ssub.s32 2560, 2560
      %2755 = vsyncadd [#allocation4], %s2754
      %s2756 = sshll.u32 [#allocation5], 4
      %s2757 = int_to_ptr.vmem [resolvable:$true] %s2756
      %2762 = dma.vmem_to_hbm [thread:$0]  %s2757, 2560, %s1, [#allocation4], 512, 512, 32
    $region13: #{tpu_custom_call.1} parent=1 // pred_fallthru
      _
    // Predicated region
    $region14: #{tpu_custom_call.1} parent=1 // pred_check
      _
    $region15: #{tpu_custom_call.1} parent=1 // pred_check_branch
      %2764 = sbr.rel (0) target = $region17
    $region16: #{tpu_custom_call.1} parent=1 // pred_region
      %2765 = dma.done [#allocation4], 2560
    $region17: #{tpu_custom_call.1} parent=1 // pred_fallthru
      _
    %2766 = vsyncpa [#allocation3], 1
    %2767 = vsyncpa [#allocation4], 1

</llo_original>
